<compile_context>
chip_gen: v5e
topology: v5e:2x2
jax: 0.10.0
libtpu: 0.0.40
codegen_flags: <defaults>
</compile_context>

<pallas_src>
import jax
import jax.numpy as jnp
from jax.experimental import pallas as pl
from jax.experimental.pallas import tpu as pltpu

IN_DIM = 768
HID = 240          # true hidden width per tower
HID_PAD = 256      # padded hidden width per tower (multiple of 128)
FUSED_HID = 2 * HID_PAD  # 512: [gender hidden | race hidden]


def adversary_kernel(x_ref, w1_ref, b1_ref, wh_ref, bh_ref, out_g_ref, out_r_ref):
    L = out_g_ref.shape[-1]

    # Fused first layers: columns 0:256 -> gender tower, 256:512 -> race tower.
    x = x_ref[...]                                                    # (TB, 768) bf16
    h = jnp.dot(x, w1_ref[...], preferred_element_type=jnp.float32)   # (TB, 512) f32
    h = h + b1_ref[...]                                                # f32 bias
    h = jnp.maximum(h, 0.0)                                            # ReLU in f32

    # Fused heads: block-diagonal (512, 2L) weight -> (TB, 2L) logits.
    heads = jnp.dot(h.astype(wh_ref.dtype), wh_ref[...],
                    preferred_element_type=jnp.float32) + bh_ref[...]

    out_g_ref[...] = heads[:, 0:L].astype(out_g_ref.dtype)
    out_r_ref[...] = heads[:, L:2 * L].astype(out_r_ref.dtype)


def pack_params(params):
    """params: (w1_g, b1_g, w2_g, b2_g, w1_r, b1_r, w2_r, b2_r), weights in (in, out)
    layout.  Returns fused/padded/bf16 arrays for the kernel."""
    w1g, b1g, w2g, b2g, w1r, b1r, w2r, b2r = params
    L = w2g.shape[1]

    # Fused first-layer weight (768, 512) and bias (1, 512); padded cols are zero
    # so padded hidden units are exactly 0 after ReLU.
    w1f = jnp.zeros((IN_DIM, FUSED_HID), jnp.float32)
    w1f = w1f.at[:, 0:HID].set(w1g)
    w1f = w1f.at[:, HID_PAD:HID_PAD + HID].set(w1r)
    b1f = jnp.zeros((1, FUSED_HID), jnp.float32)
    b1f = b1f.at[:, 0:HID].set(b1g[0])
    b1f = b1f.at[:, HID_PAD:HID_PAD + HID].set(b1r[0])

    # Fused block-diagonal head weight (512, 2L) and bias (1, 2L).
    whf = jnp.zeros((FUSED_HID, 2 * L), jnp.float32)
    whf = whf.at[0:HID, 0:L].set(w2g)
    whf = whf.at[HID_PAD:HID_PAD + HID, L:2 * L].set(w2r)
    bhf = jnp.concatenate([b2g, b2r], axis=1)                          # (1, 2L)

    return (w1f.astype(jnp.bfloat16), b1f,
            whf.astype(jnp.bfloat16), bhf)


def adversary_forward(x, packed, *, tb=512):
    """x: (B, 768) float32.  Returns (gender_logits, race_logits), each (B, L) f32."""
    w1f, b1f, whf, bhf = packed
    B = x.shape[0]
    L2 = whf.shape[1]
    L = L2 // 2

    x_bf16 = x.astype(jnp.bfloat16)

    # Batch tile: full-extent when small, else a fixed tile (multiple of 16 for bf16).
    TB = B if B <= tb else tb
    grid = (pl.cdiv(B, TB),)

    x_spec = pl.BlockSpec((TB, IN_DIM), lambda i: (i, 0))
    w1_spec = pl.BlockSpec((IN_DIM, FUSED_HID), lambda i: (0, 0))   # VMEM-resident
    b1_spec = pl.BlockSpec((1, FUSED_HID), lambda i: (0, 0))
    wh_spec = pl.BlockSpec((FUSED_HID, L2), lambda i: (0, 0))
    bh_spec = pl.BlockSpec((1, L2), lambda i: (0, 0))
    out_spec = pl.BlockSpec((TB, L), lambda i: (i, 0))

    out_shapes = (
        jax.ShapeDtypeStruct((B, L), jnp.float32),
        jax.ShapeDtypeStruct((B, L), jnp.float32),
    )

    flops = 2 * B * IN_DIM * FUSED_HID + 2 * B * FUSED_HID * L2
    bytes_accessed = (x_bf16.size * 2 + w1f.size * 2 + b1f.size * 4 +
                      whf.size * 2 + bhf.size * 4 + 2 * B * L * 4)
    cost = pl.CostEstimate(flops=flops, transcendentals=0,
                           bytes_accessed=bytes_accessed)

    return pl.pallas_call(
        adversary_kernel,
        out_shape=out_shapes,
        grid=grid,
        in_specs=[x_spec, w1_spec, b1_spec, wh_spec, bh_spec],
        out_specs=(out_spec, out_spec),
        compiler_params=pltpu.CompilerParams(
            dimension_semantics=("parallel",)),
        cost_estimate=cost,
    )(x_bf16, w1f, b1f, whf, bhf)


def init_params(seed=0, identity_labels=2):
    """Deterministic init mirroring the PyTorch module's shapes.

    a1 / a1_r: Linear(768, 240) with xavier_normal_ weights.
    a2 / a2_r: Linear(240, identity_labels) with torch-default init.
    Weights returned pre-transposed to (in, out)."""
    key = jax.random.PRNGKey(seed)
    kg1, kg2, kr1, kr2, kbg1, kbg2, kbr1, kbr2 = jax.random.split(key, 8)

    std1 = (2.0 / (IN_DIM + HID)) ** 0.5        # xavier normal
    bnd1 = 1.0 / (IN_DIM ** 0.5)                # torch default bias bound
    bnd2 = 1.0 / (HID ** 0.5)
    L = identity_labels

    w1_g = jax.random.normal(kg1, (IN_DIM, HID), jnp.float32) * std1
    b1_g = jax.random.uniform(kbg1, (1, HID), jnp.float32, -bnd1, bnd1)
    w2_g = jax.random.uniform(kg2, (HID, L), jnp.float32, -bnd2, bnd2)
    b2_g = jax.random.uniform(kbg2, (1, L), jnp.float32, -bnd2, bnd2)

    w1_r = jax.random.normal(kr1, (IN_DIM, HID), jnp.float32) * std1
    b1_r = jax.random.uniform(kbr1, (1, HID), jnp.float32, -bnd1, bnd1)
    w2_r = jax.random.uniform(kr2, (HID, L), jnp.float32, -bnd2, bnd2)
    b2_r = jax.random.uniform(kbr2, (1, L), jnp.float32, -bnd2, bnd2)

    return (w1_g, b1_g, w2_g, b2_g, w1_r, b1_r, w2_r, b2_r)


if __name__ == "__main__":
    params = init_params(seed=0, identity_labels=2)
    packed = pack_params(params)

    B = 8
    x = jax.random.normal(jax.random.PRNGKey(0), (B, IN_DIM), jnp.float32)

    out_g, out_r = adversary_forward(x, packed)
    jax.block_until_ready((out_g, out_r))

    # Pure-JAX f32 reference (two independent towers, as in the PyTorch module).
    w1_g, b1_g, w2_g, b2_g, w1_r, b1_r, w2_r, b2_r = params
    hg = jnp.maximum(x @ w1_g + b1_g, 0.0)
    hr = jnp.maximum(x @ w1_r + b1_r, 0.0)
    ref_g = hg @ w2_g + b2_g
    ref_r = hr @ w2_r + b2_r

    assert out_g.shape == (B, 2) and out_r.shape == (B, 2)
    # bf16 inputs/weights (f32 accumulation) -> loosened tolerance.
    assert jnp.allclose(out_g, ref_g, atol=5e-2, rtol=5e-2)
    assert jnp.allclose(out_r, ref_r, atol=5e-2, rtol=5e-2)

    print("KERNEL_OK")
</pallas_src>

<mosaic_0001>
module attributes {stable_mosaic.version = 11 : i64} {
  func.func @adversary_kernel(%arg0: i32, %arg1: memref<8x768xbf16, #tpu.memory_space<vmem>>, %arg2: memref<768x512xbf16, #tpu.memory_space<vmem>>, %arg3: memref<1x512xf32, #tpu.memory_space<vmem>>, %arg4: memref<512x4xbf16, #tpu.memory_space<vmem>>, %arg5: memref<1x4xf32, #tpu.memory_space<vmem>>, %arg6: memref<8x2xf32, #tpu.memory_space<vmem>>, %arg7: memref<8x2xf32, #tpu.memory_space<vmem>>) attributes {dimension_semantics = [#tpu.dimension_semantics<parallel>], iteration_bounds = array<i64: 1>, scalar_prefetch = 0 : i64, scratch_operands = 0 : i64, tpu.core_type = #tpu.core_type<tc>, window_params = [{transform_indices = @transform_0, window_bounds = array<i64: 8, 768>}, {pipeline_mode = #tpu.pipeline_mode<synchronous>, transform_indices = @transform_1, window_bounds = array<i64: 768, 512>}, {pipeline_mode = #tpu.pipeline_mode<synchronous>, transform_indices = @transform_2, window_bounds = array<i64: 1, 512>}, {pipeline_mode = #tpu.pipeline_mode<synchronous>, transform_indices = @transform_3, window_bounds = array<i64: 512, 4>}, {pipeline_mode = #tpu.pipeline_mode<synchronous>, transform_indices = @transform_4, window_bounds = array<i64: 1, 4>}, {transform_indices = @transform_5, window_bounds = array<i64: 8, 2>}, {transform_indices = @transform_6, window_bounds = array<i64: 8, 2>}]} {
    %c0 = arith.constant 0 : index
    %c0_0 = arith.constant 0 : index
    %0 = vector.load %arg1[%c0, %c0_0] : memref<8x768xbf16, #tpu.memory_space<vmem>>, vector<8x768xbf16>
    %c0_1 = arith.constant 0 : index
    %c0_2 = arith.constant 0 : index
    %1 = vector.load %arg2[%c0_1, %c0_2] : memref<768x512xbf16, #tpu.memory_space<vmem>>, vector<768x512xbf16>
    %cst = arith.constant dense<0.000000e+00> : vector<8x512xf32>
    %2 = tpu.matmul %0, %1, %cst {dimension_numbers = #tpu.dot_dimension_numbers<[1], [0], [0], [1], [0, 0, 1, 1], [], []>} : vector<8x768xbf16>, vector<768x512xbf16>, vector<8x512xf32> -> vector<8x512xf32>
    %c0_3 = arith.constant 0 : index
    %c0_4 = arith.constant 0 : index
    %3 = vector.load %arg3[%c0_3, %c0_4] : memref<1x512xf32, #tpu.memory_space<vmem>>, vector<1x512xf32>
    %4 = vector.broadcast %3 : vector<1x512xf32> to vector<8x512xf32>
    %5 = arith.addf %2, %4 : vector<8x512xf32>
    %cst_5 = arith.constant 0.000000e+00 : f32
    %6 = vector.broadcast %cst_5 : f32 to vector<8x512xf32>
    %7 = arith.maximumf %5, %6 : vector<8x512xf32>
    %8 = arith.truncf %7 : vector<8x512xf32> to vector<8x512xbf16>
    %c0_6 = arith.constant 0 : index
    %c0_7 = arith.constant 0 : index
    %9 = vector.load %arg4[%c0_6, %c0_7] : memref<512x4xbf16, #tpu.memory_space<vmem>>, vector<512x4xbf16>
    %cst_8 = arith.constant dense<0.000000e+00> : vector<8x4xf32>
    %10 = tpu.matmul %8, %9, %cst_8 {dimension_numbers = #tpu.dot_dimension_numbers<[1], [0], [0], [1], [0, 0, 1, 1], [], []>} : vector<8x512xbf16>, vector<512x4xbf16>, vector<8x4xf32> -> vector<8x4xf32>
    %c0_9 = arith.constant 0 : index
    %c0_10 = arith.constant 0 : index
    %11 = vector.load %arg5[%c0_9, %c0_10] : memref<1x4xf32, #tpu.memory_space<vmem>>, vector<1x4xf32>
    %12 = vector.broadcast %11 : vector<1x4xf32> to vector<8x4xf32>
    %13 = arith.addf %10, %12 : vector<8x4xf32>
    %14 = vector.extract_strided_slice %13 {offsets = [0, 0], sizes = [8, 2], strides = [1, 1]} : vector<8x4xf32> to vector<8x2xf32>
    %c0_11 = arith.constant 0 : index
    %c0_12 = arith.constant 0 : index
    %15 = vector.load %arg6[%c0_11, %c0_12] : memref<8x2xf32, #tpu.memory_space<vmem>>, vector<8x2xf32>
    tpu.vector_store %arg6[%c0_11, %c0_12], %14 {strides = array<i32>} : memref<8x2xf32, #tpu.memory_space<vmem>>, vector<8x2xf32>,
    %16 = vector.extract_strided_slice %13 {offsets = [0, 2], sizes = [8, 2], strides = [1, 1]} : vector<8x4xf32> to vector<8x2xf32>
    %c0_13 = arith.constant 0 : index
    %c0_14 = arith.constant 0 : index
    %17 = vector.load %arg7[%c0_13, %c0_14] : memref<8x2xf32, #tpu.memory_space<vmem>>, vector<8x2xf32>
    tpu.vector_store %arg7[%c0_13, %c0_14], %16 {strides = array<i32>} : memref<8x2xf32, #tpu.memory_space<vmem>>, vector<8x2xf32>,
    return
  }
  func.func @transform_0(%arg0: i32) -> (i32, i32) {
    %c0_i32 = arith.constant 0 : i32
    %c0_i32_0 = arith.constant 0 : i32
    return %arg0, %c0_i32 : i32, i32
  }
  func.func @transform_1(%arg0: i32) -> (i32, i32) {
    %c0_i32 = arith.constant 0 : i32
    %c0_i32_0 = arith.constant 0 : i32
    %c0_i32_1 = arith.constant 0 : i32
    return %c0_i32, %c0_i32_0 : i32, i32
  }
  func.func @transform_2(%arg0: i32) -> (i32, i32) {
    %c0_i32 = arith.constant 0 : i32
    %c0_i32_0 = arith.constant 0 : i32
    %c0_i32_1 = arith.constant 0 : i32
    return %c0_i32, %c0_i32_0 : i32, i32
  }
  func.func @transform_3(%arg0: i32) -> (i32, i32) {
    %c0_i32 = arith.constant 0 : i32
    %c0_i32_0 = arith.constant 0 : i32
    %c0_i32_1 = arith.constant 0 : i32
    return %c0_i32, %c0_i32_0 : i32, i32
  }
  func.func @transform_4(%arg0: i32) -> (i32, i32) {
    %c0_i32 = arith.constant 0 : i32
    %c0_i32_0 = arith.constant 0 : i32
    %c0_i32_1 = arith.constant 0 : i32
    return %c0_i32, %c0_i32_0 : i32, i32
  }
  func.func @transform_5(%arg0: i32) -> (i32, i32) {
    %c0_i32 = arith.constant 0 : i32
    %c0_i32_0 = arith.constant 0 : i32
    return %arg0, %c0_i32 : i32, i32
  }
  func.func @transform_6(%arg0: i32) -> (i32, i32) {
    %c0_i32 = arith.constant 0 : i32
    %c0_i32_0 = arith.constant 0 : i32
    return %arg0, %c0_i32 : i32, i32
  }
}

</mosaic_0001>

<llo_original>
// kernel: tpu_custom_call.1
$region0: #{tpu_custom_call.1}
  #allocation0 [shape = 'u32[]', space=smem, size = 0x4, offset = 0x4, fixed_abs, tag = 'smem constant byte address 0x4 - core index']
  #allocation1 [shape = 'u32[72,128]{1,0:T(1,128)}', space=vmem, size = 0x9000, scoped, tag = 'internal scratch']
  %s0 = inlined_call_operand.vmem [shape: bf16[8,768], index: 0, kind: input, shape index: {}]
  %s1 = inlined_call_operand.hbm [shape: bf16[768,512], index: 1, kind: input, shape index: {}]
  %s2 = inlined_call_operand.vmem [shape: f32[1,512], index: 2, kind: input, shape index: {}]
  %s3 = inlined_call_operand.vmem [shape: bf16[512,4], index: 3, kind: input, shape index: {}]
  %s4 = inlined_call_operand.vmem [shape: f32[1,4], index: 4, kind: input, shape index: {}]
  %s5 = inlined_call_operand.vmem [shape: f32[8,2], index: 5, kind: output, shape index: {0}]
  %s6 = inlined_call_operand.vmem [shape: f32[8,2], index: 6, kind: output, shape index: {1}]
  %7 = xla_tuple %s5, %s6
  %s8 = sld [smem:[#allocation0]]
  $region42: #{tpu_custom_call.1} parent=0
    _
  %s10 = ssub.s32 1, %s8
  %s11 = scalar_select 0, %s10, %s8
  $region1: #{tpu_custom_call.1} parent=0
    #allocation2 [shape = 'u8[786432]{0}', space=vmem, size = 0xc0000, scoped, tag = 'input window, operand 1, single buffered']
    #allocation3 [shape = 's32[1]{0}', space=sflag, size = 0x4, scoped, tag = 'scoped memory for tpu_custom_call.1']
    %12 = vsyncpa [#allocation3], 0
    // Predicated region
    $region2: #{tpu_custom_call.1} parent=1 // pred_check
      _
    $region3: #{tpu_custom_call.1} parent=1 // pred_check_branch
      %14 = sbr.rel (0) target = $region5
    $region4: #{tpu_custom_call.1} parent=1 // pred_region
      _
    $region5: #{tpu_custom_call.1} parent=1 // pred_fallthru
      _
    // Predicated region
    $region6: #{tpu_custom_call.1} parent=1 // pred_check
      _
    $region7: #{tpu_custom_call.1} parent=1 // pred_check_branch
      %16 = sbr.rel (0) target = $region9
    $region8: #{tpu_custom_call.1} parent=1 // pred_region
      %18 = vsyncadd [#allocation3], 0
      %s19 = sshll.u32 %s1, 4
      %s20 = int_to_ptr.hbm [resolvable:$true] %s19
      %s21 = sshll.u32 [#allocation2], 4
      %s22 = int_to_ptr.vmem [resolvable:$true] %s21
      %27 = dma.hbm_to_vmem [thread:$0]  %s20, 24576, %s22, [#allocation3], 256, 256, 16
    $region9: #{tpu_custom_call.1} parent=1 // pred_fallthru
      _
    // Predicated region
    $region10: #{tpu_custom_call.1} parent=1 // pred_check
      _
    $region11: #{tpu_custom_call.1} parent=1 // pred_check_branch
      %29 = sbr.rel (0) target = $region13
    $region12: #{tpu_custom_call.1} parent=1 // pred_region
      _
    $region13: #{tpu_custom_call.1} parent=1 // pred_fallthru
      _
    // Predicated region
    $region14: #{tpu_custom_call.1} parent=1 // pred_check
      _
    $region15: #{tpu_custom_call.1} parent=1 // pred_check_branch
      %31 = sbr.rel (0) target = $region17
    $region16: #{tpu_custom_call.1} parent=1 // pred_region
      _
    $region17: #{tpu_custom_call.1} parent=1 // pred_fallthru
      _
    // Predicated region
    $region18: #{tpu_custom_call.1} parent=1 // pred_check
      _
    $region19: #{tpu_custom_call.1} parent=1 // pred_check_branch
      %33 = sbr.rel (0) target = $region21
    $region20: #{tpu_custom_call.1} parent=1 // pred_region
      _
    $region21: #{tpu_custom_call.1} parent=1 // pred_fallthru
      _
    // Predicated region
    $region22: #{tpu_custom_call.1} parent=1 // pred_check
      _
    $region23: #{tpu_custom_call.1} parent=1 // pred_check_branch
      %35 = sbr.rel (0) target = $region25
    $region24: #{tpu_custom_call.1} parent=1 // pred_region
      %37 = dma.done [#allocation3], 24576
    $region25: #{tpu_custom_call.1} parent=1 // pred_fallthru
      _
    %v38 = vld [vmem:[%s0] sm:$0xff]
    %v39 = vld [vmem:[%s0 + $0x8] sm:$0xff]
    %v40 = vld [vmem:[%s0 + $0x10] sm:$0xff]
    %v41 = vld [vmem:[#allocation2] sm:$0xff]
    %v42 = vld [vmem:[#allocation2 + $0x8] sm:$0xff]
    %v43 = vld [vmem:[#allocation2 + $0x10] sm:$0xff]
    %v44 = vld [vmem:[#allocation2 + $0x18] sm:$0xff]
    %v45 = vld [vmem:[#allocation2 + $0x20] sm:$0xff]
    %v46 = vld [vmem:[#allocation2 + $0x28] sm:$0xff]
    %v47 = vld [vmem:[#allocation2 + $0x30] sm:$0xff]
    %v48 = vld [vmem:[#allocation2 + $0x38] sm:$0xff]
    %v49 = vld [vmem:[#allocation2 + $0x40] sm:$0xff]
    %v50 = vld [vmem:[#allocation2 + $0x48] sm:$0xff]
    %v51 = vld [vmem:[#allocation2 + $0x50] sm:$0xff]
    %v52 = vld [vmem:[#allocation2 + $0x58] sm:$0xff]
    %v53 = vld [vmem:[#allocation2 + $0x60] sm:$0xff]
    %v54 = vld [vmem:[#allocation2 + $0x68] sm:$0xff]
    %v55 = vld [vmem:[#allocation2 + $0x70] sm:$0xff]
    %v56 = vld [vmem:[#allocation2 + $0x78] sm:$0xff]
    %v57 = vld [vmem:[#allocation2 + $0x80] sm:$0xff]
    %v58 = vld [vmem:[#allocation2 + $0x88] sm:$0xff]
    %v59 = vld [vmem:[#allocation2 + $0x90] sm:$0xff]
    %v60 = vld [vmem:[#allocation2 + $0x98] sm:$0xff]
    %v61 = vld [vmem:[#allocation2 + $0xa0] sm:$0xff]
    %v62 = vld [vmem:[#allocation2 + $0xa8] sm:$0xff]
    %v63 = vld [vmem:[#allocation2 + $0xb0] sm:$0xff]
    %v64 = vld [vmem:[#allocation2 + $0xb8] sm:$0xff]
    %v65 = vld [vmem:[#allocation2 + $0xc0] sm:$0xff]
    %v66 = vld [vmem:[#allocation2 + $0xc8] sm:$0xff]
    %v67 = vld [vmem:[#allocation2 + $0xd0] sm:$0xff]
    %v68 = vld [vmem:[#allocation2 + $0xd8] sm:$0xff]
    %v69 = vld [vmem:[#allocation2 + $0xe0] sm:$0xff]
    %v70 = vld [vmem:[#allocation2 + $0xe8] sm:$0xff]
    %v71 = vld [vmem:[#allocation2 + $0xf0] sm:$0xff]
    %v72 = vld [vmem:[#allocation2 + $0xf8] sm:$0xff]
    %v73 = vld [vmem:[#allocation2 + $0x100] sm:$0xff]
    %v74 = vld [vmem:[#allocation2 + $0x108] sm:$0xff]
    %v75 = vld [vmem:[#allocation2 + $0x110] sm:$0xff]
    %v76 = vld [vmem:[#allocation2 + $0x118] sm:$0xff]
    %v77 = vld [vmem:[#allocation2 + $0x120] sm:$0xff]
    %v78 = vld [vmem:[#allocation2 + $0x128] sm:$0xff]
    %v79 = vld [vmem:[#allocation2 + $0x130] sm:$0xff]
    %v80 = vld [vmem:[#allocation2 + $0x138] sm:$0xff]
    %v81 = vld [vmem:[#allocation2 + $0x140] sm:$0xff]
    %v82 = vld [vmem:[#allocation2 + $0x148] sm:$0xff]
    %v83 = vld [vmem:[#allocation2 + $0x150] sm:$0xff]
    %v84 = vld [vmem:[#allocation2 + $0x158] sm:$0xff]
    %v85 = vld [vmem:[#allocation2 + $0x160] sm:$0xff]
    %v86 = vld [vmem:[#allocation2 + $0x168] sm:$0xff]
    %v87 = vld [vmem:[#allocation2 + $0x170] sm:$0xff]
    %v88 = vld [vmem:[#allocation2 + $0x178] sm:$0xff]
    %v89 = vld [vmem:[#allocation2 + $0x180] sm:$0xff]
    %v90 = vld [vmem:[#allocation2 + $0x188] sm:$0xff]
    %v91 = vld [vmem:[#allocation2 + $0x190] sm:$0xff]
    %v92 = vld [vmem:[#allocation2 + $0x198] sm:$0xff]
    %v93 = vld [vmem:[#allocation2 + $0x1a0] sm:$0xff]
    %v94 = vld [vmem:[#allocation2 + $0x1a8] sm:$0xff]
    %v95 = vld [vmem:[#allocation2 + $0x1b0] sm:$0xff]
    %v96 = vld [vmem:[#allocation2 + $0x1b8] sm:$0xff]
    %v97 = vld [vmem:[#allocation2 + $0x1c0] sm:$0xff]
    %v98 = vld [vmem:[#allocation2 + $0x1c8] sm:$0xff]
    %v99 = vld [vmem:[#allocation2 + $0x1d0] sm:$0xff]
    %v100 = vld [vmem:[#allocation2 + $0x1d8] sm:$0xff]
    %v101 = vld [vmem:[#allocation2 + $0x1e0] sm:$0xff]
    %v102 = vld [vmem:[#allocation2 + $0x1e8] sm:$0xff]
    %v103 = vld [vmem:[#allocation2 + $0x1f0] sm:$0xff]
    %v104 = vld [vmem:[#allocation2 + $0x1f8] sm:$0xff]
    %v105 = vld [vmem:[#allocation2 + $0x200] sm:$0xff]
    %v106 = vld [vmem:[#allocation2 + $0x208] sm:$0xff]
    %v107 = vld [vmem:[#allocation2 + $0x210] sm:$0xff]
    %v108 = vld [vmem:[#allocation2 + $0x218] sm:$0xff]
    %v109 = vld [vmem:[#allocation2 + $0x220] sm:$0xff]
    %v110 = vld [vmem:[#allocation2 + $0x228] sm:$0xff]
    %v111 = vld [vmem:[#allocation2 + $0x230] sm:$0xff]
    %v112 = vld [vmem:[#allocation2 + $0x238] sm:$0xff]
    %v113 = vld [vmem:[#allocation2 + $0x240] sm:$0xff]
    %v114 = vld [vmem:[#allocation2 + $0x248] sm:$0xff]
    %v115 = vld [vmem:[#allocation2 + $0x250] sm:$0xff]
    %v116 = vld [vmem:[#allocation2 + $0x258] sm:$0xff]
    %v117 = vld [vmem:[#allocation2 + $0x260] sm:$0xff]
    %v118 = vld [vmem:[#allocation2 + $0x268] sm:$0xff]
    %v119 = vld [vmem:[#allocation2 + $0x270] sm:$0xff]
    %v120 = vld [vmem:[#allocation2 + $0x278] sm:$0xff]
    %v121 = vld [vmem:[#allocation2 + $0x280] sm:$0xff]
    %v122 = vld [vmem:[#allocation2 + $0x288] sm:$0xff]
    %v123 = vld [vmem:[#allocation2 + $0x290] sm:$0xff]
    %v124 = vld [vmem:[#allocation2 + $0x298] sm:$0xff]
    %v125 = vld [vmem:[#allocation2 + $0x2a0] sm:$0xff]
    %v126 = vld [vmem:[#allocation2 + $0x2a8] sm:$0xff]
    %v127 = vld [vmem:[#allocation2 + $0x2b0] sm:$0xff]
    %v128 = vld [vmem:[#allocation2 + $0x2b8] sm:$0xff]
    %v129 = vld [vmem:[#allocation2 + $0x2c0] sm:$0xff]
    %v130 = vld [vmem:[#allocation2 + $0x2c8] sm:$0xff]
    %v131 = vld [vmem:[#allocation2 + $0x2d0] sm:$0xff]
    %v132 = vld [vmem:[#allocation2 + $0x2d8] sm:$0xff]
    %v133 = vld [vmem:[#allocation2 + $0x2e0] sm:$0xff]
    %v134 = vld [vmem:[#allocation2 + $0x2e8] sm:$0xff]
    %v135 = vld [vmem:[#allocation2 + $0x2f0] sm:$0xff]
    %v136 = vld [vmem:[#allocation2 + $0x2f8] sm:$0xff]
    %v137 = vld [vmem:[#allocation2 + $0x300] sm:$0xff]
    %v138 = vld [vmem:[#allocation2 + $0x308] sm:$0xff]
    %v139 = vld [vmem:[#allocation2 + $0x310] sm:$0xff]
    %v140 = vld [vmem:[#allocation2 + $0x318] sm:$0xff]
    %v141 = vld [vmem:[#allocation2 + $0x320] sm:$0xff]
    %v142 = vld [vmem:[#allocation2 + $0x328] sm:$0xff]
    %v143 = vld [vmem:[#allocation2 + $0x330] sm:$0xff]
    %v144 = vld [vmem:[#allocation2 + $0x338] sm:$0xff]
    %v145 = vld [vmem:[#allocation2 + $0x340] sm:$0xff]
    %v146 = vld [vmem:[#allocation2 + $0x348] sm:$0xff]
    %v147 = vld [vmem:[#allocation2 + $0x350] sm:$0xff]
    %v148 = vld [vmem:[#allocation2 + $0x358] sm:$0xff]
    %v149 = vld [vmem:[#allocation2 + $0x360] sm:$0xff]
    %v150 = vld [vmem:[#allocation2 + $0x368] sm:$0xff]
    %v151 = vld [vmem:[#allocation2 + $0x370] sm:$0xff]
    %v152 = vld [vmem:[#allocation2 + $0x378] sm:$0xff]
    %v153 = vld [vmem:[#allocation2 + $0x380] sm:$0xff]
    %v154 = vld [vmem:[#allocation2 + $0x388] sm:$0xff]
    %v155 = vld [vmem:[#allocation2 + $0x390] sm:$0xff]
    %v156 = vld [vmem:[#allocation2 + $0x398] sm:$0xff]
    %v157 = vld [vmem:[#allocation2 + $0x3a0] sm:$0xff]
    %v158 = vld [vmem:[#allocation2 + $0x3a8] sm:$0xff]
    %v159 = vld [vmem:[#allocation2 + $0x3b0] sm:$0xff]
    %v160 = vld [vmem:[#allocation2 + $0x3b8] sm:$0xff]
    %v161 = vld [vmem:[#allocation2 + $0x3c0] sm:$0xff]
    %v162 = vld [vmem:[#allocation2 + $0x3c8] sm:$0xff]
    %v163 = vld [vmem:[#allocation2 + $0x3d0] sm:$0xff]
    %v164 = vld [vmem:[#allocation2 + $0x3d8] sm:$0xff]
    %v165 = vld [vmem:[#allocation2 + $0x3e0] sm:$0xff]
    %v166 = vld [vmem:[#allocation2 + $0x3e8] sm:$0xff]
    %v167 = vld [vmem:[#allocation2 + $0x3f0] sm:$0xff]
    %v168 = vld [vmem:[#allocation2 + $0x3f8] sm:$0xff]
    %v169 = vld [vmem:[#allocation2 + $0x400] sm:$0xff]
    %v170 = vld [vmem:[#allocation2 + $0x408] sm:$0xff]
    %v171 = vld [vmem:[#allocation2 + $0x410] sm:$0xff]
    %v172 = vld [vmem:[#allocation2 + $0x418] sm:$0xff]
    %v173 = vld [vmem:[#allocation2 + $0x420] sm:$0xff]
    %v174 = vld [vmem:[#allocation2 + $0x428] sm:$0xff]
    %v175 = vld [vmem:[#allocation2 + $0x430] sm:$0xff]
    %v176 = vld [vmem:[#allocation2 + $0x438] sm:$0xff]
    %v177 = vld [vmem:[#allocation2 + $0x440] sm:$0xff]
    %v178 = vld [vmem:[#allocation2 + $0x448] sm:$0xff]
    %v179 = vld [vmem:[#allocation2 + $0x450] sm:$0xff]
    %v180 = vld [vmem:[#allocation2 + $0x458] sm:$0xff]
    %v181 = vld [vmem:[#allocation2 + $0x460] sm:$0xff]
    %v182 = vld [vmem:[#allocation2 + $0x468] sm:$0xff]
    %v183 = vld [vmem:[#allocation2 + $0x470] sm:$0xff]
    %v184 = vld [vmem:[#allocation2 + $0x478] sm:$0xff]
    %v185 = vld [vmem:[#allocation2 + $0x480] sm:$0xff]
    %v186 = vld [vmem:[#allocation2 + $0x488] sm:$0xff]
    %v187 = vld [vmem:[#allocation2 + $0x490] sm:$0xff]
    %v188 = vld [vmem:[#allocation2 + $0x498] sm:$0xff]
    %v189 = vld [vmem:[#allocation2 + $0x4a0] sm:$0xff]
    %v190 = vld [vmem:[#allocation2 + $0x4a8] sm:$0xff]
    %v191 = vld [vmem:[#allocation2 + $0x4b0] sm:$0xff]
    %v192 = vld [vmem:[#allocation2 + $0x4b8] sm:$0xff]
    %v193 = vld [vmem:[#allocation2 + $0x4c0] sm:$0xff]
    %v194 = vld [vmem:[#allocation2 + $0x4c8] sm:$0xff]
    %v195 = vld [vmem:[#allocation2 + $0x4d0] sm:$0xff]
    %v196 = vld [vmem:[#allocation2 + $0x4d8] sm:$0xff]
    %v197 = vld [vmem:[#allocation2 + $0x4e0] sm:$0xff]
    %v198 = vld [vmem:[#allocation2 + $0x4e8] sm:$0xff]
    %v199 = vld [vmem:[#allocation2 + $0x4f0] sm:$0xff]
    %v200 = vld [vmem:[#allocation2 + $0x4f8] sm:$0xff]
    %v201 = vld [vmem:[#allocation2 + $0x500] sm:$0xff]
    %v202 = vld [vmem:[#allocation2 + $0x508] sm:$0xff]
    %v203 = vld [vmem:[#allocation2 + $0x510] sm:$0xff]
    %v204 = vld [vmem:[#allocation2 + $0x518] sm:$0xff]
    %v205 = vld [vmem:[#allocation2 + $0x520] sm:$0xff]
    %v206 = vld [vmem:[#allocation2 + $0x528] sm:$0xff]
    %v207 = vld [vmem:[#allocation2 + $0x530] sm:$0xff]
    %v208 = vld [vmem:[#allocation2 + $0x538] sm:$0xff]
    %v209 = vld [vmem:[#allocation2 + $0x540] sm:$0xff]
    %v210 = vld [vmem:[#allocation2 + $0x548] sm:$0xff]
    %v211 = vld [vmem:[#allocation2 + $0x550] sm:$0xff]
    %v212 = vld [vmem:[#allocation2 + $0x558] sm:$0xff]
    %v213 = vld [vmem:[#allocation2 + $0x560] sm:$0xff]
    %v214 = vld [vmem:[#allocation2 + $0x568] sm:$0xff]
    %v215 = vld [vmem:[#allocation2 + $0x570] sm:$0xff]
    %v216 = vld [vmem:[#allocation2 + $0x578] sm:$0xff]
    %v217 = vld [vmem:[#allocation2 + $0x580] sm:$0xff]
    %v218 = vld [vmem:[#allocation2 + $0x588] sm:$0xff]
    %v219 = vld [vmem:[#allocation2 + $0x590] sm:$0xff]
    %v220 = vld [vmem:[#allocation2 + $0x598] sm:$0xff]
    %v221 = vld [vmem:[#allocation2 + $0x5a0] sm:$0xff]
    %v222 = vld [vmem:[#allocation2 + $0x5a8] sm:$0xff]
    %v223 = vld [vmem:[#allocation2 + $0x5b0] sm:$0xff]
    %v224 = vld [vmem:[#allocation2 + $0x5b8] sm:$0xff]
    %v225 = vld [vmem:[#allocation2 + $0x5c0] sm:$0xff]
    %v226 = vld [vmem:[#allocation2 + $0x5c8] sm:$0xff]
    %v227 = vld [vmem:[#allocation2 + $0x5d0] sm:$0xff]
    %v228 = vld [vmem:[#allocation2 + $0x5d8] sm:$0xff]
    %v229 = vld [vmem:[#allocation2 + $0x5e0] sm:$0xff]
    %v230 = vld [vmem:[#allocation2 + $0x5e8] sm:$0xff]
    %v231 = vld [vmem:[#allocation2 + $0x5f0] sm:$0xff]
    %v232 = vld [vmem:[#allocation2 + $0x5f8] sm:$0xff]
    %v233 = vld [vmem:[%s2] sm:$0xf]
    %v235 = vperm.slane %v233, 0
    %v236 = vperm.slane %v233, 1
    %v237 = vperm.slane %v233, 2
    %v238 = vperm.slane %v233, 3
    %v246 = vunpack.c.l.b16 %v38
    %v247 = vunpack.c.h.b16 %v38
    %v248 = vunpack.c.l.b16 %v39
    %v249 = vunpack.c.h.b16 %v39
    %v250 = vunpack.c.l.b16 %v40
    %v251 = vunpack.c.h.b16 %v40
    %v252 = vpack.c.b16 %v246, %v246
    %v253 = vpack.c.b16 %v247, %v247
    %v254 = vpack.c.b16 %v248, %v248
    %v255 = vpack.c.b16 %v249, %v249
    %v256 = vpack.c.b16 %v250, %v250
    %v257 = vpack.c.b16 %v251, %v251
    %v456 = vunpack.c.l.b16 %v41
    %v457 = vunpack.c.h.b16 %v41
    %v458 = vunpack.c.l.b16 %v42
    %v459 = vunpack.c.h.b16 %v42
    %v460 = vunpack.c.l.b16 %v43
    %v461 = vunpack.c.h.b16 %v43
    %v462 = vunpack.c.l.b16 %v44
    %v463 = vunpack.c.h.b16 %v44
    %v464 = vunpack.c.l.b16 %v45
    %v465 = vunpack.c.h.b16 %v45
    %v466 = vunpack.c.l.b16 %v46
    %v467 = vunpack.c.h.b16 %v46
    %v468 = vunpack.c.l.b16 %v47
    %v469 = vunpack.c.h.b16 %v47
    %v470 = vunpack.c.l.b16 %v48
    %v471 = vunpack.c.h.b16 %v48
    %v472 = vunpack.c.l.b16 %v49
    %v473 = vunpack.c.h.b16 %v49
    %v474 = vunpack.c.l.b16 %v50
    %v475 = vunpack.c.h.b16 %v50
    %v476 = vunpack.c.l.b16 %v51
    %v477 = vunpack.c.h.b16 %v51
    %v478 = vunpack.c.l.b16 %v52
    %v479 = vunpack.c.h.b16 %v52
    %v480 = vunpack.c.l.b16 %v53
    %v481 = vunpack.c.h.b16 %v53
    %v482 = vunpack.c.l.b16 %v54
    %v483 = vunpack.c.h.b16 %v54
    %v484 = vunpack.c.l.b16 %v55
    %v485 = vunpack.c.h.b16 %v55
    %v486 = vunpack.c.l.b16 %v56
    %v487 = vunpack.c.h.b16 %v56
    %v488 = vunpack.c.l.b16 %v57
    %v489 = vunpack.c.h.b16 %v57
    %v490 = vunpack.c.l.b16 %v58
    %v491 = vunpack.c.h.b16 %v58
    %v492 = vunpack.c.l.b16 %v59
    %v493 = vunpack.c.h.b16 %v59
    %v494 = vunpack.c.l.b16 %v60
    %v495 = vunpack.c.h.b16 %v60
    %v496 = vunpack.c.l.b16 %v61
    %v497 = vunpack.c.h.b16 %v61
    %v498 = vunpack.c.l.b16 %v62
    %v499 = vunpack.c.h.b16 %v62
    %v500 = vunpack.c.l.b16 %v63
    %v501 = vunpack.c.h.b16 %v63
    %v502 = vunpack.c.l.b16 %v64
    %v503 = vunpack.c.h.b16 %v64
    %v504 = vunpack.c.l.b16 %v65
    %v505 = vunpack.c.h.b16 %v65
    %v506 = vunpack.c.l.b16 %v66
    %v507 = vunpack.c.h.b16 %v66
    %v508 = vunpack.c.l.b16 %v67
    %v509 = vunpack.c.h.b16 %v67
    %v510 = vunpack.c.l.b16 %v68
    %v511 = vunpack.c.h.b16 %v68
    %v512 = vunpack.c.l.b16 %v69
    %v513 = vunpack.c.h.b16 %v69
    %v514 = vunpack.c.l.b16 %v70
    %v515 = vunpack.c.h.b16 %v70
    %v516 = vunpack.c.l.b16 %v71
    %v517 = vunpack.c.h.b16 %v71
    %v518 = vunpack.c.l.b16 %v72
    %v519 = vunpack.c.h.b16 %v72
    %v520 = vunpack.c.l.b16 %v73
    %v521 = vunpack.c.h.b16 %v73
    %v522 = vunpack.c.l.b16 %v74
    %v523 = vunpack.c.h.b16 %v74
    %v524 = vunpack.c.l.b16 %v75
    %v525 = vunpack.c.h.b16 %v75
    %v526 = vunpack.c.l.b16 %v76
    %v527 = vunpack.c.h.b16 %v76
    %v528 = vunpack.c.l.b16 %v77
    %v529 = vunpack.c.h.b16 %v77
    %v530 = vunpack.c.l.b16 %v78
    %v531 = vunpack.c.h.b16 %v78
    %v532 = vunpack.c.l.b16 %v79
    %v533 = vunpack.c.h.b16 %v79
    %v534 = vunpack.c.l.b16 %v80
    %v535 = vunpack.c.h.b16 %v80
    %v536 = vunpack.c.l.b16 %v81
    %v537 = vunpack.c.h.b16 %v81
    %v538 = vunpack.c.l.b16 %v82
    %v539 = vunpack.c.h.b16 %v82
    %v540 = vunpack.c.l.b16 %v83
    %v541 = vunpack.c.h.b16 %v83
    %v542 = vunpack.c.l.b16 %v84
    %v543 = vunpack.c.h.b16 %v84
    %v544 = vunpack.c.l.b16 %v85
    %v545 = vunpack.c.h.b16 %v85
    %v546 = vunpack.c.l.b16 %v86
    %v547 = vunpack.c.h.b16 %v86
    %v548 = vunpack.c.l.b16 %v87
    %v549 = vunpack.c.h.b16 %v87
    %v550 = vunpack.c.l.b16 %v88
    %v551 = vunpack.c.h.b16 %v88
    %v552 = vunpack.c.l.b16 %v89
    %v553 = vunpack.c.h.b16 %v89
    %v554 = vunpack.c.l.b16 %v90
    %v555 = vunpack.c.h.b16 %v90
    %v556 = vunpack.c.l.b16 %v91
    %v557 = vunpack.c.h.b16 %v91
    %v558 = vunpack.c.l.b16 %v92
    %v559 = vunpack.c.h.b16 %v92
    %v560 = vunpack.c.l.b16 %v93
    %v561 = vunpack.c.h.b16 %v93
    %v562 = vunpack.c.l.b16 %v94
    %v563 = vunpack.c.h.b16 %v94
    %v564 = vunpack.c.l.b16 %v95
    %v565 = vunpack.c.h.b16 %v95
    %v566 = vunpack.c.l.b16 %v96
    %v567 = vunpack.c.h.b16 %v96
    %v568 = vunpack.c.l.b16 %v97
    %v569 = vunpack.c.h.b16 %v97
    %v570 = vunpack.c.l.b16 %v98
    %v571 = vunpack.c.h.b16 %v98
    %v572 = vunpack.c.l.b16 %v99
    %v573 = vunpack.c.h.b16 %v99
    %v574 = vunpack.c.l.b16 %v100
    %v575 = vunpack.c.h.b16 %v100
    %v576 = vunpack.c.l.b16 %v101
    %v577 = vunpack.c.h.b16 %v101
    %v578 = vunpack.c.l.b16 %v102
    %v579 = vunpack.c.h.b16 %v102
    %v580 = vunpack.c.l.b16 %v103
    %v581 = vunpack.c.h.b16 %v103
    %v582 = vunpack.c.l.b16 %v104
    %v583 = vunpack.c.h.b16 %v104
    %v584 = vunpack.c.l.b16 %v105
    %v585 = vunpack.c.h.b16 %v105
    %v586 = vunpack.c.l.b16 %v106
    %v587 = vunpack.c.h.b16 %v106
    %v588 = vunpack.c.l.b16 %v107
    %v589 = vunpack.c.h.b16 %v107
    %v590 = vunpack.c.l.b16 %v108
    %v591 = vunpack.c.h.b16 %v108
    %v592 = vunpack.c.l.b16 %v109
    %v593 = vunpack.c.h.b16 %v109
    %v594 = vunpack.c.l.b16 %v110
    %v595 = vunpack.c.h.b16 %v110
    %v596 = vunpack.c.l.b16 %v111
    %v597 = vunpack.c.h.b16 %v111
    %v598 = vunpack.c.l.b16 %v112
    %v599 = vunpack.c.h.b16 %v112
    %v600 = vunpack.c.l.b16 %v113
    %v601 = vunpack.c.h.b16 %v113
    %v602 = vunpack.c.l.b16 %v114
    %v603 = vunpack.c.h.b16 %v114
    %v604 = vunpack.c.l.b16 %v115
    %v605 = vunpack.c.h.b16 %v115
    %v606 = vunpack.c.l.b16 %v116
    %v607 = vunpack.c.h.b16 %v116
    %v608 = vunpack.c.l.b16 %v117
    %v609 = vunpack.c.h.b16 %v117
    %v610 = vunpack.c.l.b16 %v118
    %v611 = vunpack.c.h.b16 %v118
    %v612 = vunpack.c.l.b16 %v119
    %v613 = vunpack.c.h.b16 %v119
    %v614 = vunpack.c.l.b16 %v120
    %v615 = vunpack.c.h.b16 %v120
    %v616 = vunpack.c.l.b16 %v121
    %v617 = vunpack.c.h.b16 %v121
    %v618 = vunpack.c.l.b16 %v122
    %v619 = vunpack.c.h.b16 %v122
    %v620 = vunpack.c.l.b16 %v123
    %v621 = vunpack.c.h.b16 %v123
    %v622 = vunpack.c.l.b16 %v124
    %v623 = vunpack.c.h.b16 %v124
    %v624 = vunpack.c.l.b16 %v125
    %v625 = vunpack.c.h.b16 %v125
    %v626 = vunpack.c.l.b16 %v126
    %v627 = vunpack.c.h.b16 %v126
    %v628 = vunpack.c.l.b16 %v127
    %v629 = vunpack.c.h.b16 %v127
    %v630 = vunpack.c.l.b16 %v128
    %v631 = vunpack.c.h.b16 %v128
    %v632 = vunpack.c.l.b16 %v129
    %v633 = vunpack.c.h.b16 %v129
    %v634 = vunpack.c.l.b16 %v130
    %v635 = vunpack.c.h.b16 %v130
    %v636 = vunpack.c.l.b16 %v131
    %v637 = vunpack.c.h.b16 %v131
    %v638 = vunpack.c.l.b16 %v132
    %v639 = vunpack.c.h.b16 %v132
    %v640 = vunpack.c.l.b16 %v133
    %v641 = vunpack.c.h.b16 %v133
    %v642 = vunpack.c.l.b16 %v134
    %v643 = vunpack.c.h.b16 %v134
    %v644 = vunpack.c.l.b16 %v135
    %v645 = vunpack.c.h.b16 %v135
    %v646 = vunpack.c.l.b16 %v136
    %v647 = vunpack.c.h.b16 %v136
    %v648 = vunpack.c.l.b16 %v137
    %v649 = vunpack.c.h.b16 %v137
    %v650 = vunpack.c.l.b16 %v138
    %v651 = vunpack.c.h.b16 %v138
    %v652 = vunpack.c.l.b16 %v139
    %v653 = vunpack.c.h.b16 %v139
    %v654 = vunpack.c.l.b16 %v140
    %v655 = vunpack.c.h.b16 %v140
    %v656 = vunpack.c.l.b16 %v141
    %v657 = vunpack.c.h.b16 %v141
    %v658 = vunpack.c.l.b16 %v142
    %v659 = vunpack.c.h.b16 %v142
    %v660 = vunpack.c.l.b16 %v143
    %v661 = vunpack.c.h.b16 %v143
    %v662 = vunpack.c.l.b16 %v144
    %v663 = vunpack.c.h.b16 %v144
    %v664 = vunpack.c.l.b16 %v145
    %v665 = vunpack.c.h.b16 %v145
    %v666 = vunpack.c.l.b16 %v146
    %v667 = vunpack.c.h.b16 %v146
    %v668 = vunpack.c.l.b16 %v147
    %v669 = vunpack.c.h.b16 %v147
    %v670 = vunpack.c.l.b16 %v148
    %v671 = vunpack.c.h.b16 %v148
    %v672 = vunpack.c.l.b16 %v149
    %v673 = vunpack.c.h.b16 %v149
    %v674 = vunpack.c.l.b16 %v150
    %v675 = vunpack.c.h.b16 %v150
    %v676 = vunpack.c.l.b16 %v151
    %v677 = vunpack.c.h.b16 %v151
    %v678 = vunpack.c.l.b16 %v152
    %v679 = vunpack.c.h.b16 %v152
    %v680 = vunpack.c.l.b16 %v153
    %v681 = vunpack.c.h.b16 %v153
    %v682 = vunpack.c.l.b16 %v154
    %v683 = vunpack.c.h.b16 %v154
    %v684 = vunpack.c.l.b16 %v155
    %v685 = vunpack.c.h.b16 %v155
    %v686 = vunpack.c.l.b16 %v156
    %v687 = vunpack.c.h.b16 %v156
    %v688 = vunpack.c.l.b16 %v157
    %v689 = vunpack.c.h.b16 %v157
    %v690 = vunpack.c.l.b16 %v158
    %v691 = vunpack.c.h.b16 %v158
    %v692 = vunpack.c.l.b16 %v159
    %v693 = vunpack.c.h.b16 %v159
    %v694 = vunpack.c.l.b16 %v160
    %v695 = vunpack.c.h.b16 %v160
    %v696 = vunpack.c.l.b16 %v161
    %v697 = vunpack.c.h.b16 %v161
    %v698 = vunpack.c.l.b16 %v162
    %v699 = vunpack.c.h.b16 %v162
    %v700 = vunpack.c.l.b16 %v163
    %v701 = vunpack.c.h.b16 %v163
    %v702 = vunpack.c.l.b16 %v164
    %v703 = vunpack.c.h.b16 %v164
    %v704 = vunpack.c.l.b16 %v165
    %v705 = vunpack.c.h.b16 %v165
    %v706 = vunpack.c.l.b16 %v166
    %v707 = vunpack.c.h.b16 %v166
    %v708 = vunpack.c.l.b16 %v167
    %v709 = vunpack.c.h.b16 %v167
    %v710 = vunpack.c.l.b16 %v168
    %v711 = vunpack.c.h.b16 %v168
    %v712 = vunpack.c.l.b16 %v169
    %v713 = vunpack.c.h.b16 %v169
    %v714 = vunpack.c.l.b16 %v170
    %v715 = vunpack.c.h.b16 %v170
    %v716 = vunpack.c.l.b16 %v171
    %v717 = vunpack.c.h.b16 %v171
    %v718 = vunpack.c.l.b16 %v172
    %v719 = vunpack.c.h.b16 %v172
    %v720 = vunpack.c.l.b16 %v173
    %v721 = vunpack.c.h.b16 %v173
    %v722 = vunpack.c.l.b16 %v174
    %v723 = vunpack.c.h.b16 %v174
    %v724 = vunpack.c.l.b16 %v175
    %v725 = vunpack.c.h.b16 %v175
    %v726 = vunpack.c.l.b16 %v176
    %v727 = vunpack.c.h.b16 %v176
    %v728 = vunpack.c.l.b16 %v177
    %v729 = vunpack.c.h.b16 %v177
    %v730 = vunpack.c.l.b16 %v178
    %v731 = vunpack.c.h.b16 %v178
    %v732 = vunpack.c.l.b16 %v179
    %v733 = vunpack.c.h.b16 %v179
    %v734 = vunpack.c.l.b16 %v180
    %v735 = vunpack.c.h.b16 %v180
    %v736 = vunpack.c.l.b16 %v181
    %v737 = vunpack.c.h.b16 %v181
    %v738 = vunpack.c.l.b16 %v182
    %v739 = vunpack.c.h.b16 %v182
    %v740 = vunpack.c.l.b16 %v183
    %v741 = vunpack.c.h.b16 %v183
    %v742 = vunpack.c.l.b16 %v184
    %v743 = vunpack.c.h.b16 %v184
    %v744 = vunpack.c.l.b16 %v185
    %v745 = vunpack.c.h.b16 %v185
    %v746 = vunpack.c.l.b16 %v186
    %v747 = vunpack.c.h.b16 %v186
    %v748 = vunpack.c.l.b16 %v187
    %v749 = vunpack.c.h.b16 %v187
    %v750 = vunpack.c.l.b16 %v188
    %v751 = vunpack.c.h.b16 %v188
    %v752 = vunpack.c.l.b16 %v189
    %v753 = vunpack.c.h.b16 %v189
    %v754 = vunpack.c.l.b16 %v190
    %v755 = vunpack.c.h.b16 %v190
    %v756 = vunpack.c.l.b16 %v191
    %v757 = vunpack.c.h.b16 %v191
    %v758 = vunpack.c.l.b16 %v192
    %v759 = vunpack.c.h.b16 %v192
    %v760 = vunpack.c.l.b16 %v193
    %v761 = vunpack.c.h.b16 %v193
    %v762 = vunpack.c.l.b16 %v194
    %v763 = vunpack.c.h.b16 %v194
    %v764 = vunpack.c.l.b16 %v195
    %v765 = vunpack.c.h.b16 %v195
    %v766 = vunpack.c.l.b16 %v196
    %v767 = vunpack.c.h.b16 %v196
    %v768 = vunpack.c.l.b16 %v197
    %v769 = vunpack.c.h.b16 %v197
    %v770 = vunpack.c.l.b16 %v198
    %v771 = vunpack.c.h.b16 %v198
    %v772 = vunpack.c.l.b16 %v199
    %v773 = vunpack.c.h.b16 %v199
    %v774 = vunpack.c.l.b16 %v200
    %v775 = vunpack.c.h.b16 %v200
    %v776 = vunpack.c.l.b16 %v201
    %v777 = vunpack.c.h.b16 %v201
    %v778 = vunpack.c.l.b16 %v202
    %v779 = vunpack.c.h.b16 %v202
    %v780 = vunpack.c.l.b16 %v203
    %v781 = vunpack.c.h.b16 %v203
    %v782 = vunpack.c.l.b16 %v204
    %v783 = vunpack.c.h.b16 %v204
    %v784 = vunpack.c.l.b16 %v205
    %v785 = vunpack.c.h.b16 %v205
    %v786 = vunpack.c.l.b16 %v206
    %v787 = vunpack.c.h.b16 %v206
    %v788 = vunpack.c.l.b16 %v207
    %v789 = vunpack.c.h.b16 %v207
    %v790 = vunpack.c.l.b16 %v208
    %v791 = vunpack.c.h.b16 %v208
    %v792 = vunpack.c.l.b16 %v209
    %v793 = vunpack.c.h.b16 %v209
    %v794 = vunpack.c.l.b16 %v210
    %v795 = vunpack.c.h.b16 %v210
    %v796 = vunpack.c.l.b16 %v211
    %v797 = vunpack.c.h.b16 %v211
    %v798 = vunpack.c.l.b16 %v212
    %v799 = vunpack.c.h.b16 %v212
    %v800 = vunpack.c.l.b16 %v213
    %v801 = vunpack.c.h.b16 %v213
    %v802 = vunpack.c.l.b16 %v214
    %v803 = vunpack.c.h.b16 %v214
    %v804 = vunpack.c.l.b16 %v215
    %v805 = vunpack.c.h.b16 %v215
    %v806 = vunpack.c.l.b16 %v216
    %v807 = vunpack.c.h.b16 %v216
    %v808 = vunpack.c.l.b16 %v217
    %v809 = vunpack.c.h.b16 %v217
    %v810 = vunpack.c.l.b16 %v218
    %v811 = vunpack.c.h.b16 %v218
    %v812 = vunpack.c.l.b16 %v219
    %v813 = vunpack.c.h.b16 %v219
    %v814 = vunpack.c.l.b16 %v220
    %v815 = vunpack.c.h.b16 %v220
    %v816 = vunpack.c.l.b16 %v221
    %v817 = vunpack.c.h.b16 %v221
    %v818 = vunpack.c.l.b16 %v222
    %v819 = vunpack.c.h.b16 %v222
    %v820 = vunpack.c.l.b16 %v223
    %v821 = vunpack.c.h.b16 %v223
    %v822 = vunpack.c.l.b16 %v224
    %v823 = vunpack.c.h.b16 %v224
    %v824 = vunpack.c.l.b16 %v225
    %v825 = vunpack.c.h.b16 %v225
    %v826 = vunpack.c.l.b16 %v226
    %v827 = vunpack.c.h.b16 %v226
    %v828 = vunpack.c.l.b16 %v227
    %v829 = vunpack.c.h.b16 %v227
    %v830 = vunpack.c.l.b16 %v228
    %v831 = vunpack.c.h.b16 %v228
    %v832 = vunpack.c.l.b16 %v229
    %v833 = vunpack.c.h.b16 %v229
    %v834 = vunpack.c.l.b16 %v230
    %v835 = vunpack.c.h.b16 %v230
    %v836 = vunpack.c.l.b16 %v231
    %v837 = vunpack.c.h.b16 %v231
    %v838 = vunpack.c.l.b16 %v232
    %v839 = vunpack.c.h.b16 %v232
    %v840 = vpack.c.b16 %v460, %v456
    %v841 = vpack.c.b16 %v461, %v457
    %v842 = vpack.c.b16 %v462, %v458
    %v843 = vpack.c.b16 %v463, %v459
    %v844 = vpack.c.b16 %v468, %v464
    %v845 = vpack.c.b16 %v469, %v465
    %v846 = vpack.c.b16 %v470, %v466
    %v847 = vpack.c.b16 %v471, %v467
    %v848 = vpack.c.b16 %v476, %v472
    %v849 = vpack.c.b16 %v477, %v473
    %v850 = vpack.c.b16 %v478, %v474
    %v851 = vpack.c.b16 %v479, %v475
    %v852 = vpack.c.b16 %v484, %v480
    %v853 = vpack.c.b16 %v485, %v481
    %v854 = vpack.c.b16 %v486, %v482
    %v855 = vpack.c.b16 %v487, %v483
    %v856 = vpack.c.b16 %v492, %v488
    %v857 = vpack.c.b16 %v493, %v489
    %v858 = vpack.c.b16 %v494, %v490
    %v859 = vpack.c.b16 %v495, %v491
    %v860 = vpack.c.b16 %v500, %v496
    %v861 = vpack.c.b16 %v501, %v497
    %v862 = vpack.c.b16 %v502, %v498
    %v863 = vpack.c.b16 %v503, %v499
    %v864 = vpack.c.b16 %v508, %v504
    %v865 = vpack.c.b16 %v509, %v505
    %v866 = vpack.c.b16 %v510, %v506
    %v867 = vpack.c.b16 %v511, %v507
    %v868 = vpack.c.b16 %v516, %v512
    %v869 = vpack.c.b16 %v517, %v513
    %v870 = vpack.c.b16 %v518, %v514
    %v871 = vpack.c.b16 %v519, %v515
    %v872 = vpack.c.b16 %v524, %v520
    %v873 = vpack.c.b16 %v525, %v521
    %v874 = vpack.c.b16 %v526, %v522
    %v875 = vpack.c.b16 %v527, %v523
    %v876 = vpack.c.b16 %v532, %v528
    %v877 = vpack.c.b16 %v533, %v529
    %v878 = vpack.c.b16 %v534, %v530
    %v879 = vpack.c.b16 %v535, %v531
    %v880 = vpack.c.b16 %v540, %v536
    %v881 = vpack.c.b16 %v541, %v537
    %v882 = vpack.c.b16 %v542, %v538
    %v883 = vpack.c.b16 %v543, %v539
    %v884 = vpack.c.b16 %v548, %v544
    %v885 = vpack.c.b16 %v549, %v545
    %v886 = vpack.c.b16 %v550, %v546
    %v887 = vpack.c.b16 %v551, %v547
    %v888 = vpack.c.b16 %v556, %v552
    %v889 = vpack.c.b16 %v557, %v553
    %v890 = vpack.c.b16 %v558, %v554
    %v891 = vpack.c.b16 %v559, %v555
    %v892 = vpack.c.b16 %v564, %v560
    %v893 = vpack.c.b16 %v565, %v561
    %v894 = vpack.c.b16 %v566, %v562
    %v895 = vpack.c.b16 %v567, %v563
    %v896 = vpack.c.b16 %v572, %v568
    %v897 = vpack.c.b16 %v573, %v569
    %v898 = vpack.c.b16 %v574, %v570
    %v899 = vpack.c.b16 %v575, %v571
    %v900 = vpack.c.b16 %v580, %v576
    %v901 = vpack.c.b16 %v581, %v577
    %v902 = vpack.c.b16 %v582, %v578
    %v903 = vpack.c.b16 %v583, %v579
    %v904 = vpack.c.b16 %v588, %v584
    %v905 = vpack.c.b16 %v589, %v585
    %v906 = vpack.c.b16 %v590, %v586
    %v907 = vpack.c.b16 %v591, %v587
    %v908 = vpack.c.b16 %v596, %v592
    %v909 = vpack.c.b16 %v597, %v593
    %v910 = vpack.c.b16 %v598, %v594
    %v911 = vpack.c.b16 %v599, %v595
    %v912 = vpack.c.b16 %v604, %v600
    %v913 = vpack.c.b16 %v605, %v601
    %v914 = vpack.c.b16 %v606, %v602
    %v915 = vpack.c.b16 %v607, %v603
    %v916 = vpack.c.b16 %v612, %v608
    %v917 = vpack.c.b16 %v613, %v609
    %v918 = vpack.c.b16 %v614, %v610
    %v919 = vpack.c.b16 %v615, %v611
    %v920 = vpack.c.b16 %v620, %v616
    %v921 = vpack.c.b16 %v621, %v617
    %v922 = vpack.c.b16 %v622, %v618
    %v923 = vpack.c.b16 %v623, %v619
    %v924 = vpack.c.b16 %v628, %v624
    %v925 = vpack.c.b16 %v629, %v625
    %v926 = vpack.c.b16 %v630, %v626
    %v927 = vpack.c.b16 %v631, %v627
    %v928 = vpack.c.b16 %v636, %v632
    %v929 = vpack.c.b16 %v637, %v633
    %v930 = vpack.c.b16 %v638, %v634
    %v931 = vpack.c.b16 %v639, %v635
    %v932 = vpack.c.b16 %v644, %v640
    %v933 = vpack.c.b16 %v645, %v641
    %v934 = vpack.c.b16 %v646, %v642
    %v935 = vpack.c.b16 %v647, %v643
    %v936 = vpack.c.b16 %v652, %v648
    %v937 = vpack.c.b16 %v653, %v649
    %v938 = vpack.c.b16 %v654, %v650
    %v939 = vpack.c.b16 %v655, %v651
    %v940 = vpack.c.b16 %v660, %v656
    %v941 = vpack.c.b16 %v661, %v657
    %v942 = vpack.c.b16 %v662, %v658
    %v943 = vpack.c.b16 %v663, %v659
    %v944 = vpack.c.b16 %v668, %v664
    %v945 = vpack.c.b16 %v669, %v665
    %v946 = vpack.c.b16 %v670, %v666
    %v947 = vpack.c.b16 %v671, %v667
    %v948 = vpack.c.b16 %v676, %v672
    %v949 = vpack.c.b16 %v677, %v673
    %v950 = vpack.c.b16 %v678, %v674
    %v951 = vpack.c.b16 %v679, %v675
    %v952 = vpack.c.b16 %v684, %v680
    %v953 = vpack.c.b16 %v685, %v681
    %v954 = vpack.c.b16 %v686, %v682
    %v955 = vpack.c.b16 %v687, %v683
    %v956 = vpack.c.b16 %v692, %v688
    %v957 = vpack.c.b16 %v693, %v689
    %v958 = vpack.c.b16 %v694, %v690
    %v959 = vpack.c.b16 %v695, %v691
    %v960 = vpack.c.b16 %v700, %v696
    %v961 = vpack.c.b16 %v701, %v697
    %v962 = vpack.c.b16 %v702, %v698
    %v963 = vpack.c.b16 %v703, %v699
    %v964 = vpack.c.b16 %v708, %v704
    %v965 = vpack.c.b16 %v709, %v705
    %v966 = vpack.c.b16 %v710, %v706
    %v967 = vpack.c.b16 %v711, %v707
    %v968 = vpack.c.b16 %v716, %v712
    %v969 = vpack.c.b16 %v717, %v713
    %v970 = vpack.c.b16 %v718, %v714
    %v971 = vpack.c.b16 %v719, %v715
    %v972 = vpack.c.b16 %v724, %v720
    %v973 = vpack.c.b16 %v725, %v721
    %v974 = vpack.c.b16 %v726, %v722
    %v975 = vpack.c.b16 %v727, %v723
    %v976 = vpack.c.b16 %v732, %v728
    %v977 = vpack.c.b16 %v733, %v729
    %v978 = vpack.c.b16 %v734, %v730
    %v979 = vpack.c.b16 %v735, %v731
    %v980 = vpack.c.b16 %v740, %v736
    %v981 = vpack.c.b16 %v741, %v737
    %v982 = vpack.c.b16 %v742, %v738
    %v983 = vpack.c.b16 %v743, %v739
    %v984 = vpack.c.b16 %v748, %v744
    %v985 = vpack.c.b16 %v749, %v745
    %v986 = vpack.c.b16 %v750, %v746
    %v987 = vpack.c.b16 %v751, %v747
    %v988 = vpack.c.b16 %v756, %v752
    %v989 = vpack.c.b16 %v757, %v753
    %v990 = vpack.c.b16 %v758, %v754
    %v991 = vpack.c.b16 %v759, %v755
    %v992 = vpack.c.b16 %v764, %v760
    %v993 = vpack.c.b16 %v765, %v761
    %v994 = vpack.c.b16 %v766, %v762
    %v995 = vpack.c.b16 %v767, %v763
    %v996 = vpack.c.b16 %v772, %v768
    %v997 = vpack.c.b16 %v773, %v769
    %v998 = vpack.c.b16 %v774, %v770
    %v999 = vpack.c.b16 %v775, %v771
    %v1000 = vpack.c.b16 %v780, %v776
    %v1001 = vpack.c.b16 %v781, %v777
    %v1002 = vpack.c.b16 %v782, %v778
    %v1003 = vpack.c.b16 %v783, %v779
    %v1004 = vpack.c.b16 %v788, %v784
    %v1005 = vpack.c.b16 %v789, %v785
    %v1006 = vpack.c.b16 %v790, %v786
    %v1007 = vpack.c.b16 %v791, %v787
    %v1008 = vpack.c.b16 %v796, %v792
    %v1009 = vpack.c.b16 %v797, %v793
    %v1010 = vpack.c.b16 %v798, %v794
    %v1011 = vpack.c.b16 %v799, %v795
    %v1012 = vpack.c.b16 %v804, %v800
    %v1013 = vpack.c.b16 %v805, %v801
    %v1014 = vpack.c.b16 %v806, %v802
    %v1015 = vpack.c.b16 %v807, %v803
    %v1016 = vpack.c.b16 %v812, %v808
    %v1017 = vpack.c.b16 %v813, %v809
    %v1018 = vpack.c.b16 %v814, %v810
    %v1019 = vpack.c.b16 %v815, %v811
    %v1020 = vpack.c.b16 %v820, %v816
    %v1021 = vpack.c.b16 %v821, %v817
    %v1022 = vpack.c.b16 %v822, %v818
    %v1023 = vpack.c.b16 %v823, %v819
    %v1024 = vpack.c.b16 %v828, %v824
    %v1025 = vpack.c.b16 %v829, %v825
    %v1026 = vpack.c.b16 %v830, %v826
    %v1027 = vpack.c.b16 %v831, %v827
    %v1028 = vpack.c.b16 %v836, %v832
    %v1029 = vpack.c.b16 %v837, %v833
    %v1030 = vpack.c.b16 %v838, %v834
    %v1031 = vpack.c.b16 %v839, %v835
    %1224 = vmatpush.bf16.msra.mxu0 %v868
    %1225 = vmatpush.bf16.msra.mxu0 %v864
    %1226 = vmatpush.bf16.msra.mxu0 %v860
    %1227 = vmatpush.bf16.msra.mxu0 %v856
    %1228 = vmatpush.bf16.msra.mxu0 %v852
    %1229 = vmatpush.bf16.msra.mxu0 %v848
    %1230 = vmatpush.bf16.msra.mxu0 %v844
    %1231 = vmatpush.bf16.msra.mxu0 %v840
    %1232 = vmatmul.bf16.gmra.mxu0 %v252
    %v1233 = vpop.f32.mrf.mxu0
    %v1234 = vadd.f32 %v235, %v1233
    %v1235 = vpop.f32.mrf.mxu0
    %1236 = vdwg.mxu0
    %1237 = vmatpush.bf16.msra.mxu0 %v900
    %1238 = vmatpush.bf16.msra.mxu0 %v896
    %1239 = vmatpush.bf16.msra.mxu0 %v892
    %1240 = vmatpush.bf16.msra.mxu0 %v888
    %1241 = vmatpush.bf16.msra.mxu0 %v884
    %1242 = vmatpush.bf16.msra.mxu0 %v880
    %1243 = vmatpush.bf16.msra.mxu0 %v876
    %1244 = vmatpush.bf16.msra.mxu0 %v872
    %1245 = vmatmul.bf16.gmra.mxu0 %v253
    %v1246 = vpop.f32.mrf.mxu0
    %v1247 = vadd.f32 %v1234, %v1246
    %v1248 = vpop.f32.mrf.mxu0
    %1249 = vdwg.mxu0
    %1250 = vmatpush.bf16.msra.mxu0 %v932
    %1251 = vmatpush.bf16.msra.mxu0 %v928
    %1252 = vmatpush.bf16.msra.mxu0 %v924
    %1253 = vmatpush.bf16.msra.mxu0 %v920
    %1254 = vmatpush.bf16.msra.mxu0 %v916
    %1255 = vmatpush.bf16.msra.mxu0 %v912
    %1256 = vmatpush.bf16.msra.mxu0 %v908
    %1257 = vmatpush.bf16.msra.mxu0 %v904
    %1258 = vmatmul.bf16.gmra.mxu0 %v254
    %v1259 = vpop.f32.mrf.mxu0
    %v1260 = vadd.f32 %v1247, %v1259
    %v1261 = vpop.f32.mrf.mxu0
    %1262 = vdwg.mxu0
    %1263 = vmatpush.bf16.msra.mxu0 %v964
    %1264 = vmatpush.bf16.msra.mxu0 %v960
    %1265 = vmatpush.bf16.msra.mxu0 %v956
    %1266 = vmatpush.bf16.msra.mxu0 %v952
    %1267 = vmatpush.bf16.msra.mxu0 %v948
    %1268 = vmatpush.bf16.msra.mxu0 %v944
    %1269 = vmatpush.bf16.msra.mxu0 %v940
    %1270 = vmatpush.bf16.msra.mxu0 %v936
    %1271 = vmatmul.bf16.gmra.mxu0 %v255
    %v1272 = vpop.f32.mrf.mxu0
    %v1273 = vadd.f32 %v1260, %v1272
    %v1274 = vpop.f32.mrf.mxu0
    %1275 = vdwg.mxu0
    %1276 = vmatpush.bf16.msra.mxu0 %v996
    %1277 = vmatpush.bf16.msra.mxu0 %v992
    %1278 = vmatpush.bf16.msra.mxu0 %v988
    %1279 = vmatpush.bf16.msra.mxu0 %v984
    %1280 = vmatpush.bf16.msra.mxu0 %v980
    %1281 = vmatpush.bf16.msra.mxu0 %v976
    %1282 = vmatpush.bf16.msra.mxu0 %v972
    %1283 = vmatpush.bf16.msra.mxu0 %v968
    %1284 = vmatmul.bf16.gmra.mxu0 %v256
    %v1285 = vpop.f32.mrf.mxu0
    %v1286 = vadd.f32 %v1273, %v1285
    %v1287 = vpop.f32.mrf.mxu0
    %1288 = vdwg.mxu0
    %1289 = vmatpush.bf16.msra.mxu0 %v1028
    %1290 = vmatpush.bf16.msra.mxu0 %v1024
    %1291 = vmatpush.bf16.msra.mxu0 %v1020
    %1292 = vmatpush.bf16.msra.mxu0 %v1016
    %1293 = vmatpush.bf16.msra.mxu0 %v1012
    %1294 = vmatpush.bf16.msra.mxu0 %v1008
    %1295 = vmatpush.bf16.msra.mxu0 %v1004
    %1296 = vmatpush.bf16.msra.mxu0 %v1000
    %1297 = vmatmul.bf16.gmra.mxu0 %v257
    %v1298 = vpop.f32.mrf.mxu0
    %v1299 = vadd.f32 %v1286, %v1298
    %v1300 = vpop.f32.mrf.mxu0
    %1301 = vdwg.mxu0
    %1302 = vmatpush.bf16.msra.mxu0 %v869
    %1303 = vmatpush.bf16.msra.mxu0 %v865
    %1304 = vmatpush.bf16.msra.mxu0 %v861
    %1305 = vmatpush.bf16.msra.mxu0 %v857
    %1306 = vmatpush.bf16.msra.mxu0 %v853
    %1307 = vmatpush.bf16.msra.mxu0 %v849
    %1308 = vmatpush.bf16.msra.mxu0 %v845
    %1309 = vmatpush.bf16.msra.mxu0 %v841
    %1310 = vmatmul.bf16.gmra.mxu0 %v252
    %v1311 = vpop.f32.mrf.mxu0
    %v1312 = vadd.f32 %v236, %v1311
    %v1313 = vpop.f32.mrf.mxu0
    %1314 = vdwg.mxu0
    %1315 = vmatpush.bf16.msra.mxu0 %v901
    %1316 = vmatpush.bf16.msra.mxu0 %v897
    %1317 = vmatpush.bf16.msra.mxu0 %v893
    %1318 = vmatpush.bf16.msra.mxu0 %v889
    %1319 = vmatpush.bf16.msra.mxu0 %v885
    %1320 = vmatpush.bf16.msra.mxu0 %v881
    %1321 = vmatpush.bf16.msra.mxu0 %v877
    %1322 = vmatpush.bf16.msra.mxu0 %v873
    %1323 = vmatmul.bf16.gmra.mxu0 %v253
    %v1324 = vpop.f32.mrf.mxu0
    %v1325 = vadd.f32 %v1312, %v1324
    %v1326 = vpop.f32.mrf.mxu0
    %1327 = vdwg.mxu0
    %1328 = vmatpush.bf16.msra.mxu0 %v933
    %1329 = vmatpush.bf16.msra.mxu0 %v929
    %1330 = vmatpush.bf16.msra.mxu0 %v925
    %1331 = vmatpush.bf16.msra.mxu0 %v921
    %1332 = vmatpush.bf16.msra.mxu0 %v917
    %1333 = vmatpush.bf16.msra.mxu0 %v913
    %1334 = vmatpush.bf16.msra.mxu0 %v909
    %1335 = vmatpush.bf16.msra.mxu0 %v905
    %1336 = vmatmul.bf16.gmra.mxu0 %v254
    %v1337 = vpop.f32.mrf.mxu0
    %v1338 = vadd.f32 %v1325, %v1337
    %v1339 = vpop.f32.mrf.mxu0
    %1340 = vdwg.mxu0
    %1341 = vmatpush.bf16.msra.mxu0 %v965
    %1342 = vmatpush.bf16.msra.mxu0 %v961
    %1343 = vmatpush.bf16.msra.mxu0 %v957
    %1344 = vmatpush.bf16.msra.mxu0 %v953
    %1345 = vmatpush.bf16.msra.mxu0 %v949
    %1346 = vmatpush.bf16.msra.mxu0 %v945
    %1347 = vmatpush.bf16.msra.mxu0 %v941
    %1348 = vmatpush.bf16.msra.mxu0 %v937
    %1349 = vmatmul.bf16.gmra.mxu0 %v255
    %v1350 = vpop.f32.mrf.mxu0
    %v1351 = vadd.f32 %v1338, %v1350
    %v1352 = vpop.f32.mrf.mxu0
    %1353 = vdwg.mxu0
    %1354 = vmatpush.bf16.msra.mxu0 %v997
    %1355 = vmatpush.bf16.msra.mxu0 %v993
    %1356 = vmatpush.bf16.msra.mxu0 %v989
    %1357 = vmatpush.bf16.msra.mxu0 %v985
    %1358 = vmatpush.bf16.msra.mxu0 %v981
    %1359 = vmatpush.bf16.msra.mxu0 %v977
    %1360 = vmatpush.bf16.msra.mxu0 %v973
    %1361 = vmatpush.bf16.msra.mxu0 %v969
    %1362 = vmatmul.bf16.gmra.mxu0 %v256
    %v1363 = vpop.f32.mrf.mxu0
    %v1364 = vadd.f32 %v1351, %v1363
    %v1365 = vpop.f32.mrf.mxu0
    %1366 = vdwg.mxu0
    %1367 = vmatpush.bf16.msra.mxu0 %v1029
    %1368 = vmatpush.bf16.msra.mxu0 %v1025
    %1369 = vmatpush.bf16.msra.mxu0 %v1021
    %1370 = vmatpush.bf16.msra.mxu0 %v1017
    %1371 = vmatpush.bf16.msra.mxu0 %v1013
    %1372 = vmatpush.bf16.msra.mxu0 %v1009
    %1373 = vmatpush.bf16.msra.mxu0 %v1005
    %1374 = vmatpush.bf16.msra.mxu0 %v1001
    %1375 = vmatmul.bf16.gmra.mxu0 %v257
    %v1376 = vpop.f32.mrf.mxu0
    %v1377 = vadd.f32 %v1364, %v1376
    %v1378 = vpop.f32.mrf.mxu0
    %1379 = vdwg.mxu0
    %1380 = vmatpush.bf16.msra.mxu0 %v870
    %1381 = vmatpush.bf16.msra.mxu0 %v866
    %1382 = vmatpush.bf16.msra.mxu0 %v862
    %1383 = vmatpush.bf16.msra.mxu0 %v858
    %1384 = vmatpush.bf16.msra.mxu0 %v854
    %1385 = vmatpush.bf16.msra.mxu0 %v850
    %1386 = vmatpush.bf16.msra.mxu0 %v846
    %1387 = vmatpush.bf16.msra.mxu0 %v842
    %1388 = vmatmul.bf16.gmra.mxu0 %v252
    %v1389 = vpop.f32.mrf.mxu0
    %v1390 = vadd.f32 %v237, %v1389
    %v1391 = vpop.f32.mrf.mxu0
    %1392 = vdwg.mxu0
    %1393 = vmatpush.bf16.msra.mxu0 %v902
    %1394 = vmatpush.bf16.msra.mxu0 %v898
    %1395 = vmatpush.bf16.msra.mxu0 %v894
    %1396 = vmatpush.bf16.msra.mxu0 %v890
    %1397 = vmatpush.bf16.msra.mxu0 %v886
    %1398 = vmatpush.bf16.msra.mxu0 %v882
    %1399 = vmatpush.bf16.msra.mxu0 %v878
    %1400 = vmatpush.bf16.msra.mxu0 %v874
    %1401 = vmatmul.bf16.gmra.mxu0 %v253
    %v1402 = vpop.f32.mrf.mxu0
    %v1403 = vadd.f32 %v1390, %v1402
    %v1404 = vpop.f32.mrf.mxu0
    %1405 = vdwg.mxu0
    %1406 = vmatpush.bf16.msra.mxu0 %v934
    %1407 = vmatpush.bf16.msra.mxu0 %v930
    %1408 = vmatpush.bf16.msra.mxu0 %v926
    %1409 = vmatpush.bf16.msra.mxu0 %v922
    %1410 = vmatpush.bf16.msra.mxu0 %v918
    %1411 = vmatpush.bf16.msra.mxu0 %v914
    %1412 = vmatpush.bf16.msra.mxu0 %v910
    %1413 = vmatpush.bf16.msra.mxu0 %v906
    %1414 = vmatmul.bf16.gmra.mxu0 %v254
    %v1415 = vpop.f32.mrf.mxu0
    %v1416 = vadd.f32 %v1403, %v1415
    %v1417 = vpop.f32.mrf.mxu0
    %1418 = vdwg.mxu0
    %1419 = vmatpush.bf16.msra.mxu0 %v966
    %1420 = vmatpush.bf16.msra.mxu0 %v962
    %1421 = vmatpush.bf16.msra.mxu0 %v958
    %1422 = vmatpush.bf16.msra.mxu0 %v954
    %1423 = vmatpush.bf16.msra.mxu0 %v950
    %1424 = vmatpush.bf16.msra.mxu0 %v946
    %1425 = vmatpush.bf16.msra.mxu0 %v942
    %1426 = vmatpush.bf16.msra.mxu0 %v938
    %1427 = vmatmul.bf16.gmra.mxu0 %v255
    %v1428 = vpop.f32.mrf.mxu0
    %v1429 = vadd.f32 %v1416, %v1428
    %v1430 = vpop.f32.mrf.mxu0
    %1431 = vdwg.mxu0
    %1432 = vmatpush.bf16.msra.mxu0 %v998
    %1433 = vmatpush.bf16.msra.mxu0 %v994
    %1434 = vmatpush.bf16.msra.mxu0 %v990
    %1435 = vmatpush.bf16.msra.mxu0 %v986
    %1436 = vmatpush.bf16.msra.mxu0 %v982
    %1437 = vmatpush.bf16.msra.mxu0 %v978
    %1438 = vmatpush.bf16.msra.mxu0 %v974
    %1439 = vmatpush.bf16.msra.mxu0 %v970
    %1440 = vmatmul.bf16.gmra.mxu0 %v256
    %v1441 = vpop.f32.mrf.mxu0
    %v1442 = vadd.f32 %v1429, %v1441
    %v1443 = vpop.f32.mrf.mxu0
    %1444 = vdwg.mxu0
    %1445 = vmatpush.bf16.msra.mxu0 %v1030
    %1446 = vmatpush.bf16.msra.mxu0 %v1026
    %1447 = vmatpush.bf16.msra.mxu0 %v1022
    %1448 = vmatpush.bf16.msra.mxu0 %v1018
    %1449 = vmatpush.bf16.msra.mxu0 %v1014
    %1450 = vmatpush.bf16.msra.mxu0 %v1010
    %1451 = vmatpush.bf16.msra.mxu0 %v1006
    %1452 = vmatpush.bf16.msra.mxu0 %v1002
    %1453 = vmatmul.bf16.gmra.mxu0 %v257
    %v1454 = vpop.f32.mrf.mxu0
    %v1455 = vadd.f32 %v1442, %v1454
    %v1456 = vpop.f32.mrf.mxu0
    %1457 = vdwg.mxu0
    %1458 = vmatpush.bf16.msra.mxu0 %v871
    %1459 = vmatpush.bf16.msra.mxu0 %v867
    %1460 = vmatpush.bf16.msra.mxu0 %v863
    %1461 = vmatpush.bf16.msra.mxu0 %v859
    %1462 = vmatpush.bf16.msra.mxu0 %v855
    %1463 = vmatpush.bf16.msra.mxu0 %v851
    %1464 = vmatpush.bf16.msra.mxu0 %v847
    %1465 = vmatpush.bf16.msra.mxu0 %v843
    %1466 = vmatmul.bf16.gmra.mxu0 %v252
    %v1467 = vpop.f32.mrf.mxu0
    %v1468 = vadd.f32 %v238, %v1467
    %v1469 = vpop.f32.mrf.mxu0
    %1470 = vdwg.mxu0
    %1471 = vmatpush.bf16.msra.mxu0 %v903
    %1472 = vmatpush.bf16.msra.mxu0 %v899
    %1473 = vmatpush.bf16.msra.mxu0 %v895
    %1474 = vmatpush.bf16.msra.mxu0 %v891
    %1475 = vmatpush.bf16.msra.mxu0 %v887
    %1476 = vmatpush.bf16.msra.mxu0 %v883
    %1477 = vmatpush.bf16.msra.mxu0 %v879
    %1478 = vmatpush.bf16.msra.mxu0 %v875
    %1479 = vmatmul.bf16.gmra.mxu0 %v253
    %v1480 = vpop.f32.mrf.mxu0
    %v1481 = vadd.f32 %v1468, %v1480
    %v1482 = vpop.f32.mrf.mxu0
    %1483 = vdwg.mxu0
    %1484 = vmatpush.bf16.msra.mxu0 %v935
    %1485 = vmatpush.bf16.msra.mxu0 %v931
    %1486 = vmatpush.bf16.msra.mxu0 %v927
    %1487 = vmatpush.bf16.msra.mxu0 %v923
    %1488 = vmatpush.bf16.msra.mxu0 %v919
    %1489 = vmatpush.bf16.msra.mxu0 %v915
    %1490 = vmatpush.bf16.msra.mxu0 %v911
    %1491 = vmatpush.bf16.msra.mxu0 %v907
    %1492 = vmatmul.bf16.gmra.mxu0 %v254
    %v1493 = vpop.f32.mrf.mxu0
    %v1494 = vadd.f32 %v1481, %v1493
    %v1495 = vpop.f32.mrf.mxu0
    %1496 = vdwg.mxu0
    %1497 = vmatpush.bf16.msra.mxu0 %v967
    %1498 = vmatpush.bf16.msra.mxu0 %v963
    %1499 = vmatpush.bf16.msra.mxu0 %v959
    %1500 = vmatpush.bf16.msra.mxu0 %v955
    %1501 = vmatpush.bf16.msra.mxu0 %v951
    %1502 = vmatpush.bf16.msra.mxu0 %v947
    %1503 = vmatpush.bf16.msra.mxu0 %v943
    %1504 = vmatpush.bf16.msra.mxu0 %v939
    %1505 = vmatmul.bf16.gmra.mxu0 %v255
    %v1506 = vpop.f32.mrf.mxu0
    %v1507 = vadd.f32 %v1494, %v1506
    %v1508 = vpop.f32.mrf.mxu0
    %1509 = vdwg.mxu0
    %1510 = vmatpush.bf16.msra.mxu0 %v999
    %1511 = vmatpush.bf16.msra.mxu0 %v995
    %1512 = vmatpush.bf16.msra.mxu0 %v991
    %1513 = vmatpush.bf16.msra.mxu0 %v987
    %1514 = vmatpush.bf16.msra.mxu0 %v983
    %1515 = vmatpush.bf16.msra.mxu0 %v979
    %1516 = vmatpush.bf16.msra.mxu0 %v975
    %1517 = vmatpush.bf16.msra.mxu0 %v971
    %1518 = vmatmul.bf16.gmra.mxu0 %v256
    %v1519 = vpop.f32.mrf.mxu0
    %v1520 = vadd.f32 %v1507, %v1519
    %v1521 = vpop.f32.mrf.mxu0
    %1522 = vdwg.mxu0
    %1523 = vmatpush.bf16.msra.mxu0 %v1031
    %1524 = vmatpush.bf16.msra.mxu0 %v1027
    %1525 = vmatpush.bf16.msra.mxu0 %v1023
    %1526 = vmatpush.bf16.msra.mxu0 %v1019
    %1527 = vmatpush.bf16.msra.mxu0 %v1015
    %1528 = vmatpush.bf16.msra.mxu0 %v1011
    %1529 = vmatpush.bf16.msra.mxu0 %v1007
    %1530 = vmatpush.bf16.msra.mxu0 %v1003
    %1531 = vmatmul.bf16.gmra.mxu0 %v257
    %v1532 = vpop.f32.mrf.mxu0
    %v1533 = vadd.f32 %v1520, %v1532
    %v1534 = vpop.f32.mrf.mxu0
    %1535 = vdwg.mxu0
    %v1536 = vmax.f32 %v1299, 0.0
    %v1537 = vmax.f32 %v1377, 0.0
    %v1538 = vmax.f32 %v1455, 0.0
    %v1539 = vmax.f32 %v1533, 0.0
    %v1540 = vpack.c.bf16 %v1536, %v1536
    %v1541 = vpack.c.bf16 %v1537, %v1537
    %v1542 = vpack.c.bf16 %v1538, %v1538
    %v1543 = vpack.c.bf16 %v1539, %v1539
    %v1544 = vld [vmem:[%s3] sm:$0xf]
    %v1545 = vld [vmem:[%s3 + $0x4] sm:$0xf]
    %v1546 = vld [vmem:[%s3 + $0x8] sm:$0xf]
    %v1547 = vld [vmem:[%s3 + $0xc] sm:$0xf]
    %v1548 = vld [vmem:[%s3 + $0x10] sm:$0xf]
    %v1549 = vld [vmem:[%s3 + $0x14] sm:$0xf]
    %v1550 = vld [vmem:[%s3 + $0x18] sm:$0xf]
    %v1551 = vld [vmem:[%s3 + $0x1c] sm:$0xf]
    %v1552 = vld [vmem:[%s3 + $0x20] sm:$0xf]
    %v1553 = vld [vmem:[%s3 + $0x24] sm:$0xf]
    %v1554 = vld [vmem:[%s3 + $0x28] sm:$0xf]
    %v1555 = vld [vmem:[%s3 + $0x2c] sm:$0xf]
    %v1556 = vld [vmem:[%s3 + $0x30] sm:$0xf]
    %v1557 = vld [vmem:[%s3 + $0x34] sm:$0xf]
    %v1558 = vld [vmem:[%s3 + $0x38] sm:$0xf]
    %v1559 = vld [vmem:[%s3 + $0x3c] sm:$0xf]
    %v1560 = vld [vmem:[%s3 + $0x40] sm:$0xf]
    %v1561 = vld [vmem:[%s3 + $0x44] sm:$0xf]
    %v1562 = vld [vmem:[%s3 + $0x48] sm:$0xf]
    %v1563 = vld [vmem:[%s3 + $0x4c] sm:$0xf]
    %v1564 = vld [vmem:[%s3 + $0x50] sm:$0xf]
    %v1565 = vld [vmem:[%s3 + $0x54] sm:$0xf]
    %v1566 = vld [vmem:[%s3 + $0x58] sm:$0xf]
    %v1567 = vld [vmem:[%s3 + $0x5c] sm:$0xf]
    %v1568 = vld [vmem:[%s3 + $0x60] sm:$0xf]
    %v1569 = vld [vmem:[%s3 + $0x64] sm:$0xf]
    %v1570 = vld [vmem:[%s3 + $0x68] sm:$0xf]
    %v1571 = vld [vmem:[%s3 + $0x6c] sm:$0xf]
    %v1572 = vld [vmem:[%s3 + $0x70] sm:$0xf]
    %v1573 = vld [vmem:[%s3 + $0x74] sm:$0xf]
    %v1574 = vld [vmem:[%s3 + $0x78] sm:$0xf]
    %v1575 = vld [vmem:[%s3 + $0x7c] sm:$0xf]
    %v1576 = vld [vmem:[%s3 + $0x80] sm:$0xf]
    %v1577 = vld [vmem:[%s3 + $0x84] sm:$0xf]
    %v1578 = vld [vmem:[%s3 + $0x88] sm:$0xf]
    %v1579 = vld [vmem:[%s3 + $0x8c] sm:$0xf]
    %v1580 = vld [vmem:[%s3 + $0x90] sm:$0xf]
    %v1581 = vld [vmem:[%s3 + $0x94] sm:$0xf]
    %v1582 = vld [vmem:[%s3 + $0x98] sm:$0xf]
    %v1583 = vld [vmem:[%s3 + $0x9c] sm:$0xf]
    %v1584 = vld [vmem:[%s3 + $0xa0] sm:$0xf]
    %v1585 = vld [vmem:[%s3 + $0xa4] sm:$0xf]
    %v1586 = vld [vmem:[%s3 + $0xa8] sm:$0xf]
    %v1587 = vld [vmem:[%s3 + $0xac] sm:$0xf]
    %v1588 = vld [vmem:[%s3 + $0xb0] sm:$0xf]
    %v1589 = vld [vmem:[%s3 + $0xb4] sm:$0xf]
    %v1590 = vld [vmem:[%s3 + $0xb8] sm:$0xf]
    %v1591 = vld [vmem:[%s3 + $0xbc] sm:$0xf]
    %v1592 = vld [vmem:[%s3 + $0xc0] sm:$0xf]
    %v1593 = vld [vmem:[%s3 + $0xc4] sm:$0xf]
    %v1594 = vld [vmem:[%s3 + $0xc8] sm:$0xf]
    %v1595 = vld [vmem:[%s3 + $0xcc] sm:$0xf]
    %v1596 = vld [vmem:[%s3 + $0xd0] sm:$0xf]
    %v1597 = vld [vmem:[%s3 + $0xd4] sm:$0xf]
    %v1598 = vld [vmem:[%s3 + $0xd8] sm:$0xf]
    %v1599 = vld [vmem:[%s3 + $0xdc] sm:$0xf]
    %v1600 = vld [vmem:[%s3 + $0xe0] sm:$0xf]
    %v1601 = vld [vmem:[%s3 + $0xe4] sm:$0xf]
    %v1602 = vld [vmem:[%s3 + $0xe8] sm:$0xf]
    %v1603 = vld [vmem:[%s3 + $0xec] sm:$0xf]
    %v1604 = vld [vmem:[%s3 + $0xf0] sm:$0xf]
    %v1605 = vld [vmem:[%s3 + $0xf4] sm:$0xf]
    %v1606 = vld [vmem:[%s3 + $0xf8] sm:$0xf]
    %v1607 = vld [vmem:[%s3 + $0xfc] sm:$0xf]
    %v1608 = vld [vmem:[%s4] sm:$0x1]
    %v1610 = vperm.slane %v1608, 0
    %v1676 = vunpack.c.l.b16 %v1544
    %v1677 = vunpack.c.l.b16 %v1545
    %v1678 = vunpack.c.l.b16 %v1546
    %v1679 = vunpack.c.l.b16 %v1547
    %v1680 = vunpack.c.l.b16 %v1548
    %v1681 = vunpack.c.l.b16 %v1549
    %v1682 = vunpack.c.l.b16 %v1550
    %v1683 = vunpack.c.l.b16 %v1551
    %v1684 = vunpack.c.l.b16 %v1552
    %v1685 = vunpack.c.l.b16 %v1553
    %v1686 = vunpack.c.l.b16 %v1554
    %v1687 = vunpack.c.l.b16 %v1555
    %v1688 = vunpack.c.l.b16 %v1556
    %v1689 = vunpack.c.l.b16 %v1557
    %v1690 = vunpack.c.l.b16 %v1558
    %v1691 = vunpack.c.l.b16 %v1559
    %v1692 = vunpack.c.l.b16 %v1560
    %v1693 = vunpack.c.l.b16 %v1561
    %v1694 = vunpack.c.l.b16 %v1562
    %v1695 = vunpack.c.l.b16 %v1563
    %v1696 = vunpack.c.l.b16 %v1564
    %v1697 = vunpack.c.l.b16 %v1565
    %v1698 = vunpack.c.l.b16 %v1566
    %v1699 = vunpack.c.l.b16 %v1567
    %v1700 = vunpack.c.l.b16 %v1568
    %v1701 = vunpack.c.l.b16 %v1569
    %v1702 = vunpack.c.l.b16 %v1570
    %v1703 = vunpack.c.l.b16 %v1571
    %v1704 = vunpack.c.l.b16 %v1572
    %v1705 = vunpack.c.l.b16 %v1573
    %v1706 = vunpack.c.l.b16 %v1574
    %v1707 = vunpack.c.l.b16 %v1575
    %v1708 = vunpack.c.l.b16 %v1576
    %v1709 = vunpack.c.l.b16 %v1577
    %v1710 = vunpack.c.l.b16 %v1578
    %v1711 = vunpack.c.l.b16 %v1579
    %v1712 = vunpack.c.l.b16 %v1580
    %v1713 = vunpack.c.l.b16 %v1581
    %v1714 = vunpack.c.l.b16 %v1582
    %v1715 = vunpack.c.l.b16 %v1583
    %v1716 = vunpack.c.l.b16 %v1584
    %v1717 = vunpack.c.l.b16 %v1585
    %v1718 = vunpack.c.l.b16 %v1586
    %v1719 = vunpack.c.l.b16 %v1587
    %v1720 = vunpack.c.l.b16 %v1588
    %v1721 = vunpack.c.l.b16 %v1589
    %v1722 = vunpack.c.l.b16 %v1590
    %v1723 = vunpack.c.l.b16 %v1591
    %v1724 = vunpack.c.l.b16 %v1592
    %v1725 = vunpack.c.l.b16 %v1593
    %v1726 = vunpack.c.l.b16 %v1594
    %v1727 = vunpack.c.l.b16 %v1595
    %v1728 = vunpack.c.l.b16 %v1596
    %v1729 = vunpack.c.l.b16 %v1597
    %v1730 = vunpack.c.l.b16 %v1598
    %v1731 = vunpack.c.l.b16 %v1599
    %v1732 = vunpack.c.l.b16 %v1600
    %v1733 = vunpack.c.l.b16 %v1601
    %v1734 = vunpack.c.l.b16 %v1602
    %v1735 = vunpack.c.l.b16 %v1603
    %v1736 = vunpack.c.l.b16 %v1604
    %v1737 = vunpack.c.l.b16 %v1605
    %v1738 = vunpack.c.l.b16 %v1606
    %v1739 = vunpack.c.l.b16 %v1607
    %v1740 = vpack.c.b16 %v1677, %v1676
    %v1741 = vpack.c.b16 %v1679, %v1678
    %v1742 = vpack.c.b16 %v1681, %v1680
    %v1743 = vpack.c.b16 %v1683, %v1682
    %v1744 = vpack.c.b16 %v1685, %v1684
    %v1745 = vpack.c.b16 %v1687, %v1686
    %v1746 = vpack.c.b16 %v1689, %v1688
    %v1747 = vpack.c.b16 %v1691, %v1690
    %v1748 = vpack.c.b16 %v1693, %v1692
    %v1749 = vpack.c.b16 %v1695, %v1694
    %v1750 = vpack.c.b16 %v1697, %v1696
    %v1751 = vpack.c.b16 %v1699, %v1698
    %v1752 = vpack.c.b16 %v1701, %v1700
    %v1753 = vpack.c.b16 %v1703, %v1702
    %v1754 = vpack.c.b16 %v1705, %v1704
    %v1755 = vpack.c.b16 %v1707, %v1706
    %v1756 = vpack.c.b16 %v1709, %v1708
    %v1757 = vpack.c.b16 %v1711, %v1710
    %v1758 = vpack.c.b16 %v1713, %v1712
    %v1759 = vpack.c.b16 %v1715, %v1714
    %v1760 = vpack.c.b16 %v1717, %v1716
    %v1761 = vpack.c.b16 %v1719, %v1718
    %v1762 = vpack.c.b16 %v1721, %v1720
    %v1763 = vpack.c.b16 %v1723, %v1722
    %v1764 = vpack.c.b16 %v1725, %v1724
    %v1765 = vpack.c.b16 %v1727, %v1726
    %v1766 = vpack.c.b16 %v1729, %v1728
    %v1767 = vpack.c.b16 %v1731, %v1730
    %v1768 = vpack.c.b16 %v1733, %v1732
    %v1769 = vpack.c.b16 %v1735, %v1734
    %v1770 = vpack.c.b16 %v1737, %v1736
    %v1771 = vpack.c.b16 %v1739, %v1738
    %1804 = vmatpush.bf16.msra.mxu0 %v1747
    %1805 = vmatpush.bf16.msra.mxu0 %v1746
    %1806 = vmatpush.bf16.msra.mxu0 %v1745
    %1807 = vmatpush.bf16.msra.mxu0 %v1744
    %1808 = vmatpush.bf16.msra.mxu0 %v1743
    %1809 = vmatpush.bf16.msra.mxu0 %v1742
    %1810 = vmatpush.bf16.msra.mxu0 %v1741
    %1811 = vmatpush.bf16.msra.mxu0 %v1740
    %1812 = vmatmul.bf16.gmra.mxu0 %v1540
    %v1813 = vpop.f32.mrf.mxu0
    %v1814 = vadd.f32 %v1610, %v1813
    %v1815 = vpop.f32.mrf.mxu0
    %1816 = vdwg.mxu0
    %1817 = vmatpush.bf16.msra.mxu0 %v1755
    %1818 = vmatpush.bf16.msra.mxu0 %v1754
    %1819 = vmatpush.bf16.msra.mxu0 %v1753
    %1820 = vmatpush.bf16.msra.mxu0 %v1752
    %1821 = vmatpush.bf16.msra.mxu0 %v1751
    %1822 = vmatpush.bf16.msra.mxu0 %v1750
    %1823 = vmatpush.bf16.msra.mxu0 %v1749
    %1824 = vmatpush.bf16.msra.mxu0 %v1748
    %1825 = vmatmul.bf16.gmra.mxu0 %v1541
    %v1826 = vpop.f32.mrf.mxu0
    %v1827 = vadd.f32 %v1814, %v1826
    %v1828 = vpop.f32.mrf.mxu0
    %1829 = vdwg.mxu0
    %1830 = vmatpush.bf16.msra.mxu0 %v1763
    %1831 = vmatpush.bf16.msra.mxu0 %v1762
    %1832 = vmatpush.bf16.msra.mxu0 %v1761
    %1833 = vmatpush.bf16.msra.mxu0 %v1760
    %1834 = vmatpush.bf16.msra.mxu0 %v1759
    %1835 = vmatpush.bf16.msra.mxu0 %v1758
    %1836 = vmatpush.bf16.msra.mxu0 %v1757
    %1837 = vmatpush.bf16.msra.mxu0 %v1756
    %1838 = vmatmul.bf16.gmra.mxu0 %v1542
    %v1839 = vpop.f32.mrf.mxu0
    %v1840 = vadd.f32 %v1827, %v1839
    %v1841 = vpop.f32.mrf.mxu0
    %1842 = vdwg.mxu0
    %1843 = vmatpush.bf16.msra.mxu0 %v1771
    %1844 = vmatpush.bf16.msra.mxu0 %v1770
    %1845 = vmatpush.bf16.msra.mxu0 %v1769
    %1846 = vmatpush.bf16.msra.mxu0 %v1768
    %1847 = vmatpush.bf16.msra.mxu0 %v1767
    %1848 = vmatpush.bf16.msra.mxu0 %v1766
    %1849 = vmatpush.bf16.msra.mxu0 %v1765
    %1850 = vmatpush.bf16.msra.mxu0 %v1764
    %1851 = vmatmul.bf16.gmra.mxu0 %v1543
    %v1852 = vpop.f32.mrf.mxu0
    %v1853 = vadd.f32 %v1840, %v1852
    %v1854 = vpop.f32.mrf.mxu0
    %1855 = vdwg.mxu0
    %vm1856 = vcmask 15360
    %1857 = vst.msk [vmem:[%s5] sm:$0xff] %vm1856, %v1853
    %1859 = vrot.lane.b32.xlu0 %v1853, 126
    %v1860 = vpop.permute.xlu0 %1859
    %1862 = vst.msk [vmem:[%s6] sm:$0xff] %vm1856, %v1860
    // Predicated region
    $region26: #{tpu_custom_call.1} parent=1 // pred_check
      _
    $region27: #{tpu_custom_call.1} parent=1 // pred_check_branch
      %1864 = sbr.rel (0) target = $region29
    $region28: #{tpu_custom_call.1} parent=1 // pred_region
      _
    $region29: #{tpu_custom_call.1} parent=1 // pred_fallthru
      _
    // Predicated region
    $region30: #{tpu_custom_call.1} parent=1 // pred_check
      _
    $region31: #{tpu_custom_call.1} parent=1 // pred_check_branch
      %1866 = sbr.rel (0) target = $region33
    $region32: #{tpu_custom_call.1} parent=1 // pred_region
      _
    $region33: #{tpu_custom_call.1} parent=1 // pred_fallthru
      _
    // Predicated region
    $region34: #{tpu_custom_call.1} parent=1 // pred_check
      _
    $region35: #{tpu_custom_call.1} parent=1 // pred_check_branch
      %1868 = sbr.rel (0) target = $region37
    $region36: #{tpu_custom_call.1} parent=1 // pred_region
      _
    $region37: #{tpu_custom_call.1} parent=1 // pred_fallthru
      _
    // Predicated region
    $region38: #{tpu_custom_call.1} parent=1 // pred_check
      _
    $region39: #{tpu_custom_call.1} parent=1 // pred_check_branch
      %1870 = sbr.rel (0) target = $region41
    $region40: #{tpu_custom_call.1} parent=1 // pred_region
      _
    $region41: #{tpu_custom_call.1} parent=1 // pred_fallthru
      _
    %1871 = vsyncpa [#allocation3], 1

</llo_original>
